<compile_context>
chip_gen: v5e
topology: v5e:2x2
jax: 0.10.0
libtpu: 0.0.40
codegen_flags: <defaults>
</compile_context>

<pallas_src>
import jax
import jax.numpy as jnp
from jax.experimental import pallas as pl
from jax.experimental.pallas import tpu as pltpu

HIDDEN = 512                        # conv1 output channels (fixed by the module)
_HID_CHUNK = 128                    # hidden chunk processed per MXU dot
_VMEM_BUDGET = 16 * 1024 * 1024     # tile-picking budget (honest estimate below)
_VMEM_LIMIT = 32 * 1024 * 1024      # scoped VMEM limit passed to Mosaic


def _da_img_head_kernel(x_ref, w1_ref, b1_ref, w2_ref, b2_ref, o_ref):
    # x_ref:  (1, C, tm)  input dtype (f32 NCHW slab; cast to bf16 in-kernel)
    # w1_ref: (HIDDEN, C) bf16   conv1 1x1 weight (out-ch on sublanes)
    # b1_ref: (HIDDEN, 1) f32    conv1 bias column
    # w2_ref: (HIDDEN, 1) f32    conv2 1x1 weight column
    # b2_ref: (1,)        f32    conv2 bias (SMEM scalar)
    # o_ref:  (1, 1, tm)  f32    per-pixel domain logits (lane-dense)
    tm = x_ref.shape[-1]
    x = x_ref[0].astype(jnp.bfloat16)                    # (C, tm) cast once, reused
    acc = jnp.zeros((1, tm), jnp.float32)
    for c in range(HIDDEN // _HID_CHUNK):                # static unroll (4 chunks)
        lo = c * _HID_CHUNK
        hi = lo + _HID_CHUNK
        # (128, C) x (C, tm) bf16 on the MXU, f32 accumulation.
        h = jnp.dot(w1_ref[lo:hi, :], x, preferred_element_type=jnp.float32)
        p = jnp.maximum(h + b1_ref[lo:hi, :], 0.0)       # bias + ReLU in f32
        # Second 1x1 conv (512 -> 1): broadcast-multiply + sublane reduce keeps
        # the width-1 output off the MXU and the result lane-dense.
        acc = acc + jnp.sum(p * w2_ref[lo:hi, :], axis=0, keepdims=True)
    out = acc + b2_ref[0]
    o_ref[...] = out[None].astype(o_ref.dtype)           # (1, 1, tm)


def _vmem_bytes(C, tm, x_itemsize):
    """Honest per-call VMEM estimate for tile selection."""
    lanes = pl.cdiv(tm, 128) * 128
    c_sub = pl.cdiv(C, 8) * 8
    return (
        2 * c_sub * lanes * x_itemsize              # double-buffered x tile
        + 2 * 8 * lanes * 4                         # double-buffered (1,1,tm) out tile
        + c_sub * lanes * 2                         # in-kernel bf16 copy of the x tile
        + HIDDEN * lanes * 4                        # worst-case live chunked hidden (f32)
        + 2 * HIDDEN * pl.cdiv(C, 128) * 128 * 2    # W1 bf16, two pipeline buffers
        + 4 * HIDDEN * 128 * 4                      # b1 + w2 columns (lane-padded), 2 bufs each
    )


def _pick_tile(HW, C, x_itemsize, tm_max):
    """Largest 128-multiple pixel tile under the VMEM budget (or full HW if tiny)."""
    if HW <= 128:
        return HW                                   # full-dim block; no 128-divisibility needed
    tm = min(tm_max, HW)
    tm = max(128, (tm // 128) * 128)
    while tm > 128 and _vmem_bytes(C, tm, x_itemsize) > _VMEM_BUDGET:
        tm = max(128, (tm // 2 // 128) * 128)
    return tm


def _run_head(x3, w1, b1, w2, b2, *, tm):
    N, C, HW = x3.shape
    grid = (N, pl.cdiv(HW, tm))
    return pl.pallas_call(
        _da_img_head_kernel,
        out_shape=jax.ShapeDtypeStruct((N, 1, HW), jnp.float32),
        grid_spec=pltpu.PrefetchScalarGridSpec(
            num_scalar_prefetch=0,
            grid=grid,
            in_specs=[
                # x tile straight from the NCHW slab (no host transpose/pad).
                # If xprof shows exposed DMA on v7x, add pipeline_mode=pl.Buffered(3).
                pl.BlockSpec((1, C, tm), lambda n, i: (n, 0, i)),
                pl.BlockSpec((HIDDEN, C), lambda n, i: (0, 0)),      # W1 (resident)
                pl.BlockSpec((HIDDEN, 1), lambda n, i: (0, 0)),      # b1
                pl.BlockSpec((HIDDEN, 1), lambda n, i: (0, 0)),      # w2
                pl.BlockSpec(memory_space=pltpu.MemorySpace.SMEM),   # b2 scalar
            ],
            out_specs=pl.BlockSpec((1, 1, tm), lambda n, i: (n, 0, i)),
        ),
        compiler_params=pltpu.CompilerParams(
            dimension_semantics=("parallel", "parallel"),
            vmem_limit_bytes=_VMEM_LIMIT,
        ),
    )(x3, w1, b1, w2, b2)


def da_img_head_forward(x_dict, params, *, tm_max=4096):
    """x_dict: {level: NCHW array}; params: {level: (w1 (512,C), b1 (512,),
    w2 (512,), b2 (1,))}.  Returns {level: (N, 1, H, W)} f32 domain logits,
    matching the PyTorch module.  W1 is cast to bf16 (tiny, one-time); x is
    cast to bf16 inside the kernel; all accumulation is f32."""
    img_features = {}
    for level, x in x_dict.items():
        w1, b1, w2, b2 = params[level]
        N, C, H, W = x.shape
        HW = H * W
        x3 = x.reshape(N, C, HW)                               # free: NCHW is contiguous
        w1_c = w1.astype(jnp.bfloat16)
        b1_c = b1.reshape(HIDDEN, 1).astype(jnp.float32)
        w2_c = w2.reshape(HIDDEN, 1).astype(jnp.float32)
        b2_c = jnp.asarray(b2, jnp.float32).reshape(1)
        tm = _pick_tile(HW, C, jnp.dtype(x.dtype).itemsize, tm_max)
        out = _run_head(x3, w1_c, b1_c, w2_c, b2_c, tm=tm)     # (N, 1, HW)
        img_features[level] = out.reshape(N, 1, H, W)
    return img_features


def init_params(key, in_channels, levels):
    """Mirror the PyTorch init: conv weights ~ Normal(0, 0.001), biases = 0."""
    params = {}
    for level in levels:
        key, k1, k2 = jax.random.split(key, 3)
        w1 = jax.random.normal(k1, (HIDDEN, in_channels), jnp.float32) * 0.001
        b1 = jnp.zeros((HIDDEN,), jnp.float32)
        w2 = jax.random.normal(k2, (HIDDEN,), jnp.float32) * 0.001
        b2 = jnp.zeros((1,), jnp.float32)
        params[level] = (w1, b1, w2, b2)
    return params


def _randomize_biases(params, key):
    """Give the (normally zero-init) biases nonzero values so the bias paths
    are actually exercised by the correctness check."""
    out = {}
    for i, (level, (w1, b1, w2, b2)) in enumerate(sorted(params.items())):
        kb1, kb2 = jax.random.split(jax.random.fold_in(key, i))
        out[level] = (
            w1,
            jax.random.normal(kb1, b1.shape, jnp.float32) * 0.01,
            w2,
            jax.random.normal(kb2, b2.shape, jnp.float32) * 0.05,
        )
    return out


def _reference_forward(x_dict, params):
    """Pure-JAX f32 reference (same math, no Pallas)."""
    out = {}
    for level, x in x_dict.items():
        w1, b1, w2, b2 = params[level]
        N, C, H, W = x.shape
        xf = jnp.transpose(x, (0, 2, 3, 1)).reshape(-1, C)     # (M, C)
        h = jnp.maximum(xf @ w1.T + b1[None, :], 0.0)          # (M, 512)
        y = h @ w2[:, None] + b2                               # (M, 1)
        out[level] = y.reshape(N, H, W, 1).transpose(0, 3, 1, 2)
    return out


if __name__ == "__main__":
    key = jax.random.PRNGKey(0)

    # Head A: tiny channel count (C=4) -> small-K MXU path.
    levels_a = ["p2", "p3"]
    key, kpa, kba, kx2, kx3 = jax.random.split(key, 5)
    params_a = _randomize_biases(init_params(kpa, 4, levels_a), kba)
    x_a = {
        "p2": jax.random.normal(kx2, (2, 4, 16, 16), jnp.float32),
        "p3": jax.random.normal(kx3, (2, 4, 8, 8), jnp.float32),
    }

    # Head B: FPN-like channel count (C=256) -> full MXU path.
    levels_b = ["p4"]
    key, kpb, kbb, kx4 = jax.random.split(key, 4)
    params_b = _randomize_biases(init_params(kpb, 256, levels_b), kbb)
    x_b = {"p4": jax.random.normal(kx4, (1, 256, 8, 8), jnp.float32)}

    for x_dict, params in ((x_a, params_a), (x_b, params_b)):
        ref = _reference_forward(x_dict, params)
        out = da_img_head_forward(x_dict, params)
        out = jax.tree_util.tree_map(jax.block_until_ready, out)
        for level, x in x_dict.items():
            N, C, H, W = x.shape
            assert out[level].shape == (N, 1, H, W), out[level].shape
            assert jnp.allclose(out[level], ref[level], atol=3e-4, rtol=5e-2), (
                "mismatch", level)

    print("KERNEL_OK")
</pallas_src>

<mosaic_0001>
module attributes {stable_mosaic.version = 11 : i64} {
  func.func @_da_img_head_kernel(%arg0: i32, %arg1: i32, %arg2: memref<1x4x256xf32, #tpu.memory_space<vmem>>, %arg3: memref<512x4xbf16, #tpu.memory_space<vmem>>, %arg4: memref<512x1xf32, #tpu.memory_space<vmem>>, %arg5: memref<512x1xf32, #tpu.memory_space<vmem>>, %arg6: memref<1xf32, #tpu.memory_space<smem>>, %arg7: memref<1x1x256xf32, #tpu.memory_space<vmem>>) attributes {dimension_semantics = [#tpu.dimension_semantics<parallel>, #tpu.dimension_semantics<parallel>], iteration_bounds = array<i64: 2, 1>, scalar_prefetch = 0 : i64, scratch_operands = 0 : i64, tpu.core_type = #tpu.core_type<tc>, window_params = [{transform_indices = @transform_0, window_bounds = array<i64: 1, 4, 256>}, {pipeline_mode = #tpu.pipeline_mode<synchronous>, transform_indices = @transform_1, window_bounds = array<i64: 512, 4>}, {pipeline_mode = #tpu.pipeline_mode<synchronous>, transform_indices = @transform_2, window_bounds = array<i64: 512, 1>}, {pipeline_mode = #tpu.pipeline_mode<synchronous>, transform_indices = @transform_3, window_bounds = array<i64: 512, 1>}, {transform_indices = @transform_4, window_bounds = array<i64: 1>}, {transform_indices = @transform_5, window_bounds = array<i64: 1, 1, 256>}]} {
    %c0 = arith.constant 0 : index
    %c0_0 = arith.constant 0 : index
    %c0_1 = arith.constant 0 : index
    %0 = vector.load %arg2[%c0, %c0_0, %c0_1] : memref<1x4x256xf32, #tpu.memory_space<vmem>>, vector<1x4x256xf32>
    %1 = vector.shape_cast %0 : vector<1x4x256xf32> to vector<4x256xf32>
    %2 = arith.truncf %1 : vector<4x256xf32> to vector<4x256xbf16>
    %cst = arith.constant 0.000000e+00 : f32
    %3 = vector.broadcast %cst : f32 to vector<1x256xf32>
    %c0_2 = arith.constant 0 : index
    %c0_3 = arith.constant 0 : index
    %4 = vector.load %arg3[%c0_2, %c0_3] : memref<512x4xbf16, #tpu.memory_space<vmem>>, vector<128x4xbf16>
    %cst_4 = arith.constant dense<0.000000e+00> : vector<128x256xf32>
    %5 = tpu.matmul %4, %2, %cst_4 {dimension_numbers = #tpu.dot_dimension_numbers<[1], [0], [0], [1], [0, 0, 1, 1], [], []>} : vector<128x4xbf16>, vector<4x256xbf16>, vector<128x256xf32> -> vector<128x256xf32>
    %c0_5 = arith.constant 0 : index
    %c0_6 = arith.constant 0 : index
    %6 = vector.load %arg4[%c0_5, %c0_6] : memref<512x1xf32, #tpu.memory_space<vmem>>, vector<128x1xf32>
    %7 = vector.broadcast %6 : vector<128x1xf32> to vector<128x256xf32>
    %8 = arith.addf %5, %7 : vector<128x256xf32>
    %cst_7 = arith.constant 0.000000e+00 : f32
    %9 = vector.broadcast %cst_7 : f32 to vector<128x256xf32>
    %10 = arith.maximumf %8, %9 : vector<128x256xf32>
    %c0_8 = arith.constant 0 : index
    %c0_9 = arith.constant 0 : index
    %11 = vector.load %arg5[%c0_8, %c0_9] : memref<512x1xf32, #tpu.memory_space<vmem>>, vector<128x1xf32>
    %12 = vector.broadcast %11 : vector<128x1xf32> to vector<128x256xf32>
    %13 = arith.mulf %10, %12 : vector<128x256xf32>
    %cst_10 = arith.constant dense<0.000000e+00> : vector<256xf32>
    %14 = vector.multi_reduction <add>, %13, %cst_10 [0] : vector<128x256xf32> to vector<256xf32>
    %15 = vector.shape_cast %14 : vector<256xf32> to vector<1x256xf32>
    %16 = arith.addf %3, %15 : vector<1x256xf32>
    %c128 = arith.constant 128 : index
    %c0_11 = arith.constant 0 : index
    %17 = vector.load %arg3[%c128, %c0_11] : memref<512x4xbf16, #tpu.memory_space<vmem>>, vector<128x4xbf16>
    %cst_12 = arith.constant dense<0.000000e+00> : vector<128x256xf32>
    %18 = tpu.matmul %17, %2, %cst_12 {dimension_numbers = #tpu.dot_dimension_numbers<[1], [0], [0], [1], [0, 0, 1, 1], [], []>} : vector<128x4xbf16>, vector<4x256xbf16>, vector<128x256xf32> -> vector<128x256xf32>
    %c128_13 = arith.constant 128 : index
    %c0_14 = arith.constant 0 : index
    %19 = vector.load %arg4[%c128_13, %c0_14] : memref<512x1xf32, #tpu.memory_space<vmem>>, vector<128x1xf32>
    %20 = vector.broadcast %19 : vector<128x1xf32> to vector<128x256xf32>
    %21 = arith.addf %18, %20 : vector<128x256xf32>
    %cst_15 = arith.constant 0.000000e+00 : f32
    %22 = vector.broadcast %cst_15 : f32 to vector<128x256xf32>
    %23 = arith.maximumf %21, %22 : vector<128x256xf32>
    %c128_16 = arith.constant 128 : index
    %c0_17 = arith.constant 0 : index
    %24 = vector.load %arg5[%c128_16, %c0_17] : memref<512x1xf32, #tpu.memory_space<vmem>>, vector<128x1xf32>
    %25 = vector.broadcast %24 : vector<128x1xf32> to vector<128x256xf32>
    %26 = arith.mulf %23, %25 : vector<128x256xf32>
    %cst_18 = arith.constant dense<0.000000e+00> : vector<256xf32>
    %27 = vector.multi_reduction <add>, %26, %cst_18 [0] : vector<128x256xf32> to vector<256xf32>
    %28 = vector.shape_cast %27 : vector<256xf32> to vector<1x256xf32>
    %29 = arith.addf %16, %28 : vector<1x256xf32>
    %c256 = arith.constant 256 : index
    %c0_19 = arith.constant 0 : index
    %30 = vector.load %arg3[%c256, %c0_19] : memref<512x4xbf16, #tpu.memory_space<vmem>>, vector<128x4xbf16>
    %cst_20 = arith.constant dense<0.000000e+00> : vector<128x256xf32>
    %31 = tpu.matmul %30, %2, %cst_20 {dimension_numbers = #tpu.dot_dimension_numbers<[1], [0], [0], [1], [0, 0, 1, 1], [], []>} : vector<128x4xbf16>, vector<4x256xbf16>, vector<128x256xf32> -> vector<128x256xf32>
    %c256_21 = arith.constant 256 : index
    %c0_22 = arith.constant 0 : index
    %32 = vector.load %arg4[%c256_21, %c0_22] : memref<512x1xf32, #tpu.memory_space<vmem>>, vector<128x1xf32>
    %33 = vector.broadcast %32 : vector<128x1xf32> to vector<128x256xf32>
    %34 = arith.addf %31, %33 : vector<128x256xf32>
    %cst_23 = arith.constant 0.000000e+00 : f32
    %35 = vector.broadcast %cst_23 : f32 to vector<128x256xf32>
    %36 = arith.maximumf %34, %35 : vector<128x256xf32>
    %c256_24 = arith.constant 256 : index
    %c0_25 = arith.constant 0 : index
    %37 = vector.load %arg5[%c256_24, %c0_25] : memref<512x1xf32, #tpu.memory_space<vmem>>, vector<128x1xf32>
    %38 = vector.broadcast %37 : vector<128x1xf32> to vector<128x256xf32>
    %39 = arith.mulf %36, %38 : vector<128x256xf32>
    %cst_26 = arith.constant dense<0.000000e+00> : vector<256xf32>
    %40 = vector.multi_reduction <add>, %39, %cst_26 [0] : vector<128x256xf32> to vector<256xf32>
    %41 = vector.shape_cast %40 : vector<256xf32> to vector<1x256xf32>
    %42 = arith.addf %29, %41 : vector<1x256xf32>
    %c384 = arith.constant 384 : index
    %c0_27 = arith.constant 0 : index
    %43 = vector.load %arg3[%c384, %c0_27] : memref<512x4xbf16, #tpu.memory_space<vmem>>, vector<128x4xbf16>
    %cst_28 = arith.constant dense<0.000000e+00> : vector<128x256xf32>
    %44 = tpu.matmul %43, %2, %cst_28 {dimension_numbers = #tpu.dot_dimension_numbers<[1], [0], [0], [1], [0, 0, 1, 1], [], []>} : vector<128x4xbf16>, vector<4x256xbf16>, vector<128x256xf32> -> vector<128x256xf32>
    %c384_29 = arith.constant 384 : index
    %c0_30 = arith.constant 0 : index
    %45 = vector.load %arg4[%c384_29, %c0_30] : memref<512x1xf32, #tpu.memory_space<vmem>>, vector<128x1xf32>
    %46 = vector.broadcast %45 : vector<128x1xf32> to vector<128x256xf32>
    %47 = arith.addf %44, %46 : vector<128x256xf32>
    %cst_31 = arith.constant 0.000000e+00 : f32
    %48 = vector.broadcast %cst_31 : f32 to vector<128x256xf32>
    %49 = arith.maximumf %47, %48 : vector<128x256xf32>
    %c384_32 = arith.constant 384 : index
    %c0_33 = arith.constant 0 : index
    %50 = vector.load %arg5[%c384_32, %c0_33] : memref<512x1xf32, #tpu.memory_space<vmem>>, vector<128x1xf32>
    %51 = vector.broadcast %50 : vector<128x1xf32> to vector<128x256xf32>
    %52 = arith.mulf %49, %51 : vector<128x256xf32>
    %cst_34 = arith.constant dense<0.000000e+00> : vector<256xf32>
    %53 = vector.multi_reduction <add>, %52, %cst_34 [0] : vector<128x256xf32> to vector<256xf32>
    %54 = vector.shape_cast %53 : vector<256xf32> to vector<1x256xf32>
    %55 = arith.addf %42, %54 : vector<1x256xf32>
    %c0_35 = arith.constant 0 : index
    %56 = memref.load %arg6[%c0_35] : memref<1xf32, #tpu.memory_space<smem>>
    %57 = vector.broadcast %56 : f32 to vector<1x256xf32>
    %58 = arith.addf %55, %57 : vector<1x256xf32>
    %59 = vector.shape_cast %58 : vector<1x256xf32> to vector<1x1x256xf32>
    %c0_36 = arith.constant 0 : index
    %c0_37 = arith.constant 0 : index
    %c0_38 = arith.constant 0 : index
    %60 = vector.load %arg7[%c0_36, %c0_37, %c0_38] : memref<1x1x256xf32, #tpu.memory_space<vmem>>, vector<1x1x256xf32>
    tpu.vector_store %arg7[%c0_36, %c0_37, %c0_38], %59 {strides = array<i32>} : memref<1x1x256xf32, #tpu.memory_space<vmem>>, vector<1x1x256xf32>,
    return
  }
  func.func @transform_0(%arg0: i32, %arg1: i32) -> (i32, i32, i32) {
    %c0_i32 = arith.constant 0 : i32
    %c0_i32_0 = arith.constant 0 : i32
    return %arg0, %c0_i32, %arg1 : i32, i32, i32
  }
  func.func @transform_1(%arg0: i32, %arg1: i32) -> (i32, i32) {
    %c0_i32 = arith.constant 0 : i32
    %c0_i32_0 = arith.constant 0 : i32
    %c0_i32_1 = arith.constant 0 : i32
    return %c0_i32, %c0_i32_0 : i32, i32
  }
  func.func @transform_2(%arg0: i32, %arg1: i32) -> (i32, i32) {
    %c0_i32 = arith.constant 0 : i32
    %c0_i32_0 = arith.constant 0 : i32
    %c0_i32_1 = arith.constant 0 : i32
    return %c0_i32, %c0_i32_0 : i32, i32
  }
  func.func @transform_3(%arg0: i32, %arg1: i32) -> (i32, i32) {
    %c0_i32 = arith.constant 0 : i32
    %c0_i32_0 = arith.constant 0 : i32
    %c0_i32_1 = arith.constant 0 : i32
    return %c0_i32, %c0_i32_0 : i32, i32
  }
  func.func @transform_4(%arg0: i32, %arg1: i32) -> i32 {
    %c0_i32 = arith.constant 0 : i32
    %c0_i32_0 = arith.constant 0 : i32
    return %c0_i32 : i32
  }
  func.func @transform_5(%arg0: i32, %arg1: i32) -> (i32, i32, i32) {
    %c0_i32 = arith.constant 0 : i32
    %c0_i32_0 = arith.constant 0 : i32
    return %arg0, %c0_i32, %arg1 : i32, i32, i32
  }
}

</mosaic_0001>

<llo_original>
// kernel: tpu_custom_call.1
$region0: #{tpu_custom_call.1}
  #allocation0 [shape = 'u32[]', space=smem, size = 0x4, offset = 0x4, fixed_abs, tag = 'smem constant byte address 0x4 - core index']
  #allocation1 [shape = 'u32[72,128]{1,0:T(1,128)}', space=vmem, size = 0x9000, scoped, tag = 'internal scratch']
  #allocation2 [shape = 'f32[1]{0:T(128)S(6)}', space=smem, size = 0x200, scoped, tag = 'scoped memory for tpu_custom_call.1']
  %s0 = inlined_call_operand.vmem [shape: f32[2,4,256], index: 0, kind: input, shape index: {}]
  %s1 = inlined_call_operand.vmem [shape: bf16[512,4], index: 1, kind: input, shape index: {}]
  %s2 = inlined_call_operand.vmem [shape: f32[512,1], index: 2, kind: input, shape index: {}]
  %s3 = inlined_call_operand.vmem [shape: f32[512,1], index: 3, kind: input, shape index: {}]
  %s4 = inlined_call_operand.<no memory space> [shape: f32[1], index: 4, kind: input, shape index: {}]
  %s5 = inlined_call_operand.hbm [shape: f32[2,1,256], index: 5, kind: output, shape index: {}]
  %s6 = sld [smem:[#allocation0]]
  $region53: #{tpu_custom_call.1} parent=0
    _
  %s8 = ssub.s32 1, %s6
  %s9 = scalar_select 0, %s8, %s6
  %10 = sst [smem:[#allocation2]] %s4
  $region1: #{tpu_custom_call.1} parent=0
    #allocation3 [shape = 'u8[2048]{0}', space=vmem, size = 0x800, scoped, tag = 'output window, operand 0']
    #allocation4 [shape = 's32[2]{0}', space=sflag, size = 0x8, scoped, tag = 'scoped memory for tpu_custom_call.1']
    %11 = vsyncpa [#allocation4], 0
    %s12 = scalar_lea.sflag [#allocation4], 1
    %13 = vsyncpa %s12, 0
    loop: start=0, step=1, limit=4
    $region2: #{tpu_custom_call.1} parent=1 // loop_pre_header
      _
    $region3: #{tpu_custom_call.1} parent=1 // loop_header
      %s15 = sphi 0, %s19
      %p16 = scmp.ge.s32.totalorder %s15, 4
      %s22 = sphi 0, %s34
      %s23 = sphi 0, %s30
      %s24 = sphi 0, %s22
      %s25 = sphi 0, %s23
      %s26 = sphi 0, %s24
      %s27 = sphi 0, %s25
      %s39 = sphi 0, %s41
      %s42 = sphi 0, %s39
      %s43 = sphi 0, %s42
      %s59 = sphi 0, %s43
      %s63 = sphi 0, %s63
      %s65 = sphi 0, %s63
      %s66 = sphi 0, %s65
      %s80 = sphi 0, %s66
      %s84 = sphi 0, %s84
      %s86 = sphi 0, %s84
      %s87 = sphi 0, %s86
      %s101 = sphi 0, %s87
      %s105 = sphi 0, %s105
      %s107 = sphi 0, %s105
      %s108 = sphi 0, %s107
      %s122 = sphi 0, %s108
      %s126 = sphi 0, %s126
      %s128 = sphi 0, %s126
      %s129 = sphi 0, %s128
      %s143 = sphi 0, %s129
      %s151 = sphi 0, %s153
      %s154 = sphi 0, %s151
      %s155 = sphi 0, %s154
      %s171 = sphi 0, %s155
    $region4: #{tpu_custom_call.1} parent=1 // loop_header_branch
      %18 = sbr.rel (%p16) target = $region8
    $region5: #{tpu_custom_call.1} parent=1 // loop_body
      %s20 = ssub.s32 %s15, 1
      %s21 = ssub.s32 %s15, 2
      %s28 = sadd.s32 1, %s23
      %p29 = scmp.ge.s32.totalorder %s28, 1
      %s30 = scalar_select %p29, 0, %s28
      %s31 = sadd.s32 1, %s22
      %s32 = scalar_select %p29, %s31, %s22
      %p33 = scmp.ge.s32.totalorder %s32, 2
      %s34 = scalar_select %p33, 0, %s32
      %s35 = ssub.s32 %s22, %s34
      %s36 = ssub.s32 %s23, %s30
      %s37 = sor.u32 %s35, %s36
      %p38 = scmp.eq.s32.totalorder %s37, 0
      %s40 = sadd.s32 %s39, 1
      %s41 = scalar_select %p38, %s39, %s40
      %p44 = pneg %p38
      %p45 = scmp.eq.s32.totalorder %s15, 1
      %p46 = por %p44, %p45
      %p47 = scmp.ne.s32.totalorder %s39, %s42
      %p48 = scmp.eq.s32.totalorder %s15, 0
      %p49 = por %p47, %p48
      %p50 = scmp.ne.s32.totalorder %s39, %s42
      %p51 = scmp.eq.s32.totalorder %s20, 1
      %p52 = por %p50, %p51
      %p53 = scmp.ne.s32.totalorder %s42, %s43
      %p54 = scmp.eq.s32.totalorder %s20, 0
      %p55 = por %p53, %p54
      %p56 = scmp.ne.s32.totalorder %s42, %s43
      %p57 = scmp.eq.s32.totalorder %s21, 1
      %p58 = por %p56, %p57
      %p60 = scmp.ne.s32.totalorder %s43, %s59
      %p61 = scmp.eq.s32.totalorder %s21, 0
      %p62 = por %p60, %p61
      %s64 = sadd.s32 %s63, 1
      %p67 = scmp.eq.s32.totalorder %s15, 1
      %p68 = scmp.ne.s32.totalorder %s63, %s65
      %p69 = scmp.eq.s32.totalorder %s15, 0
      %p70 = por %p68, %p69
      %p71 = scmp.ne.s32.totalorder %s63, %s65
      %p72 = scmp.eq.s32.totalorder %s20, 1
      %p73 = por %p71, %p72
      %p74 = scmp.ne.s32.totalorder %s65, %s66
      %p75 = scmp.eq.s32.totalorder %s20, 0
      %p76 = por %p74, %p75
      %p77 = scmp.ne.s32.totalorder %s65, %s66
      %p78 = scmp.eq.s32.totalorder %s21, 1
      %p79 = por %p77, %p78
      %p81 = scmp.ne.s32.totalorder %s66, %s80
      %p82 = scmp.eq.s32.totalorder %s21, 0
      %p83 = por %p81, %p82
      %s85 = sadd.s32 %s84, 1
      %p88 = scmp.eq.s32.totalorder %s15, 1
      %p89 = scmp.ne.s32.totalorder %s84, %s86
      %p90 = scmp.eq.s32.totalorder %s15, 0
      %p91 = por %p89, %p90
      %p92 = scmp.ne.s32.totalorder %s84, %s86
      %p93 = scmp.eq.s32.totalorder %s20, 1
      %p94 = por %p92, %p93
      %p95 = scmp.ne.s32.totalorder %s86, %s87
      %p96 = scmp.eq.s32.totalorder %s20, 0
      %p97 = por %p95, %p96
      %p98 = scmp.ne.s32.totalorder %s86, %s87
      %p99 = scmp.eq.s32.totalorder %s21, 1
      %p100 = por %p98, %p99
      %p102 = scmp.ne.s32.totalorder %s87, %s101
      %p103 = scmp.eq.s32.totalorder %s21, 0
      %p104 = por %p102, %p103
      %s106 = sadd.s32 %s105, 1
      %p109 = scmp.eq.s32.totalorder %s15, 1
      %p110 = scmp.ne.s32.totalorder %s105, %s107
      %p111 = scmp.eq.s32.totalorder %s15, 0
      %p112 = por %p110, %p111
      %p113 = scmp.ne.s32.totalorder %s105, %s107
      %p114 = scmp.eq.s32.totalorder %s20, 1
      %p115 = por %p113, %p114
      %p116 = scmp.ne.s32.totalorder %s107, %s108
      %p117 = scmp.eq.s32.totalorder %s20, 0
      %p118 = por %p116, %p117
      %p119 = scmp.ne.s32.totalorder %s107, %s108
      %p120 = scmp.eq.s32.totalorder %s21, 1
      %p121 = por %p119, %p120
      %p123 = scmp.ne.s32.totalorder %s108, %s122
      %p124 = scmp.eq.s32.totalorder %s21, 0
      %p125 = por %p123, %p124
      %s127 = sadd.s32 %s126, 1
      %p130 = scmp.eq.s32.totalorder %s15, 1
      %p131 = scmp.ne.s32.totalorder %s126, %s128
      %p132 = scmp.eq.s32.totalorder %s15, 0
      %p133 = por %p131, %p132
      %p134 = scmp.ne.s32.totalorder %s126, %s128
      %p135 = scmp.eq.s32.totalorder %s20, 1
      %p136 = por %p134, %p135
      %p137 = scmp.ne.s32.totalorder %s128, %s129
      %p138 = scmp.eq.s32.totalorder %s20, 0
      %p139 = por %p137, %p138
      %p140 = scmp.ne.s32.totalorder %s128, %s129
      %p141 = scmp.eq.s32.totalorder %s21, 1
      %p142 = por %p140, %p141
      %p144 = scmp.ne.s32.totalorder %s129, %s143
      %p145 = scmp.eq.s32.totalorder %s21, 0
      %p146 = por %p144, %p145
      %s147 = ssub.s32 %s22, %s34
      %s148 = ssub.s32 %s23, %s30
      %s149 = sor.u32 %s147, %s148
      %p150 = scmp.eq.s32.totalorder %s149, 0
      %s152 = sadd.s32 %s151, 1
      %s153 = scalar_select %p150, %s151, %s152
      %p156 = pneg %p150
      %p157 = scmp.eq.s32.totalorder %s15, 1
      %p158 = por %p156, %p157
      %p159 = scmp.ne.s32.totalorder %s151, %s154
      %p160 = scmp.eq.s32.totalorder %s15, 0
      %p161 = por %p159, %p160
      %p162 = scmp.ne.s32.totalorder %s151, %s154
      %p163 = scmp.eq.s32.totalorder %s20, 1
      %p164 = por %p162, %p163
      %p165 = scmp.ne.s32.totalorder %s154, %s155
      %p166 = scmp.eq.s32.totalorder %s20, 0
      %p167 = por %p165, %p166
      %p168 = scmp.ne.s32.totalorder %s154, %s155
      %p169 = scmp.eq.s32.totalorder %s21, 1
      %p170 = por %p168, %p169
      %p172 = scmp.ne.s32.totalorder %s155, %s171
      %p173 = scmp.eq.s32.totalorder %s21, 0
      %p174 = por %p172, %p173
      %p175 = scmp.le.s32.totalorder 1, %s15
      %p176 = scmp.lt.s32.totalorder %s15, 3
      %p177 = pnand %p175, %p176
      %p178 = pneg %p177
      // Predicated region
      $region9: #{tpu_custom_call.1} parent=5 // pred_check
        _
      $region10: #{tpu_custom_call.1} parent=5 // pred_check_branch
        %180 = sbr.rel (%p177) target = $region12
      $region11: #{tpu_custom_call.1} parent=5 // pred_region
        %s181 = ssub.s32 %s15, 1
        // Predicated region
        $region13: #{tpu_custom_call.1} parent=11 // pred_check
          %p182 = pneg %p76
        $region14: #{tpu_custom_call.1} parent=11 // pred_check_branch
          %184 = sbr.rel (%p182) target = $region16
        $region15: #{tpu_custom_call.1} parent=11 // pred_region
          _
        $region16: #{tpu_custom_call.1} parent=11 // pred_fallthru
          _
        // Predicated region
        $region17: #{tpu_custom_call.1} parent=11 // pred_check
          %p185 = pneg %p97
        $region18: #{tpu_custom_call.1} parent=11 // pred_check_branch
          %187 = sbr.rel (%p185) target = $region20
        $region19: #{tpu_custom_call.1} parent=11 // pred_region
          _
        $region20: #{tpu_custom_call.1} parent=11 // pred_fallthru
          _
        // Predicated region
        $region21: #{tpu_custom_call.1} parent=11 // pred_check
          %p188 = pneg %p118
        $region22: #{tpu_custom_call.1} parent=11 // pred_check_branch
          %190 = sbr.rel (%p188) target = $region24
        $region23: #{tpu_custom_call.1} parent=11 // pred_region
          _
        $region24: #{tpu_custom_call.1} parent=11 // pred_fallthru
          _
        // Predicated region
        $region25: #{tpu_custom_call.1} parent=11 // pred_check
          %p191 = pneg %p139
        $region26: #{tpu_custom_call.1} parent=11 // pred_check_branch
          %193 = sbr.rel (%p191) target = $region28
        $region27: #{tpu_custom_call.1} parent=11 // pred_region
          _
        $region28: #{tpu_custom_call.1} parent=11 // pred_fallthru
          _
      $region12: #{tpu_custom_call.1} parent=5 // pred_fallthru
        _
      %p194 = scmp.lt.s32.totalorder %s15, 2
      // Predicated region
      $region29: #{tpu_custom_call.1} parent=5 // pred_check
        %p195 = pneg %p194
      $region30: #{tpu_custom_call.1} parent=5 // pred_check_branch
        %197 = sbr.rel (%p195) target = $region32
      $region31: #{tpu_custom_call.1} parent=5 // pred_region
        // Predicated region
        $region33: #{tpu_custom_call.1} parent=31 // pred_check
          %p198 = pneg %p49
        $region34: #{tpu_custom_call.1} parent=31 // pred_check_branch
          %200 = sbr.rel (%p198) target = $region36
        $region35: #{tpu_custom_call.1} parent=31 // pred_region
          %s201 = smul.u32 2, %s23
          %p202 = scmp.lt.s32.totalorder %s22, 1
          %s203 = scalar_select %p202, %s22, 1
          %p204 = scmp.lt.s32.totalorder %s201, 1
          %s205 = scalar_select %p204, %s201, 1
          %s206 = smul.addr %s203, 2
          %s207 = sadd.s32 %s205, %s206
          %s208 = smul.addr %s207, 4
          %s209 = scalar_lea.vmem %s0, %s208
          %s210 = smul.u32 2, %s23
        $region36: #{tpu_custom_call.1} parent=31 // pred_fallthru
          _
      $region32: #{tpu_custom_call.1} parent=5 // pred_fallthru
        _
      %p211 = scmp.le.s32.totalorder 1, %s15
      %p212 = scmp.lt.s32.totalorder %s15, 3
      %p213 = pnand %p211, %p212
      %p214 = pneg %p213
      // Predicated region
      $region37: #{tpu_custom_call.1} parent=5 // pred_check
        _
      $region38: #{tpu_custom_call.1} parent=5 // pred_check_branch
        %216 = sbr.rel (%p213) target = $region40
      $region39: #{tpu_custom_call.1} parent=5 // pred_region
        %s217 = ssub.s32 %s15, 1
        %s218 = smul.u32 2, %s25
        %p219 = scmp.lt.s32.totalorder %s24, 1
        %s220 = scalar_select %p219, %s24, 1
        %p221 = scmp.lt.s32.totalorder %s218, 1
        %s222 = scalar_select %p221, %s218, 1
        %s223 = smul.addr %s220, 2
        %s224 = sadd.s32 %s222, %s223
        %s225 = smul.addr %s224, 4
        %s226 = scalar_lea.vmem %s0, %s225
        %p227 = pneg %p55
        %p228 = pneg %p52
        %p229 = pneg %p76
        %p230 = pneg %p73
        %p231 = pneg %p97
        %p232 = pneg %p94
        %p233 = pneg %p118
        %p234 = pneg %p115
        %p235 = pneg %p139
        %p236 = pneg %p136
        %p237 = pneg %p167
        %p238 = pneg %p164
        %s239 = sand.u32 %s154, 1
        %s240 = scalar_lea.sflag [#allocation4], %s239
        %s241 = sand.u32 %s154, 1
        %s242 = smul.addr %s241, 2
        %s243 = scalar_lea.vmem [#allocation3], %s242
        %s244 = smul.u32 2, %s25
        %p245 = scmp.lt.s32.totalorder %s24, 1
        %s246 = scalar_select %p245, %s24, 1
        %p247 = scmp.lt.s32.totalorder %s244, 1
        %s248 = scalar_select %p247, %s244, 1
        %s249 = smul.addr %s246, 2
        %s250 = sadd.s32 %s248, %s249
        %s251 = smul.addr %s250, 4
        %s252 = scalar_lea.vmem %s0, %s251
        %s253 = smul.u32 2, %s25
        %s254 = smul.u32 2, %s25
        %v256 = vld [vmem:[%s252] sm:$0xff]
        %258 = vst [vmem:[#allocation1] ss:$2 sm:$0xff] %v256
        %v259 = vld.sshfl [vmem:[#allocation1] sm:$0xff pattern:$0x75316420]
        %v260 = vld.sshfl [vmem:[#allocation1 + $0x8] sm:$0xff pattern:$0x75316420]
        %v263 = vpack.c.bf16 %v259, %v259
        %v264 = vpack.c.bf16 %v260, %v260
        %v265 = vld [vmem:[%s1] sm:$0xf]
        %v266 = vld [vmem:[%s1 + $0x4] sm:$0xf]
        %v267 = vld [vmem:[%s1 + $0x8] sm:$0xf]
        %v268 = vld [vmem:[%s1 + $0xc] sm:$0xf]
        %v269 = vld [vmem:[%s1 + $0x10] sm:$0xf]
        %v270 = vld [vmem:[%s1 + $0x14] sm:$0xf]
        %v271 = vld [vmem:[%s1 + $0x18] sm:$0xf]
        %v272 = vld [vmem:[%s1 + $0x1c] sm:$0xf]
        %v273 = vld [vmem:[%s1 + $0x20] sm:$0xf]
        %v274 = vld [vmem:[%s1 + $0x24] sm:$0xf]
        %v275 = vld [vmem:[%s1 + $0x28] sm:$0xf]
        %v276 = vld [vmem:[%s1 + $0x2c] sm:$0xf]
        %v277 = vld [vmem:[%s1 + $0x30] sm:$0xf]
        %v278 = vld [vmem:[%s1 + $0x34] sm:$0xf]
        %v279 = vld [vmem:[%s1 + $0x38] sm:$0xf]
        %v280 = vld [vmem:[%s1 + $0x3c] sm:$0xf]
        %v281 = vld [vmem:[%s2] sm:$0xff]
        %v282 = vld [vmem:[%s2 + $0x8] sm:$0xff]
        %v283 = vld [vmem:[%s2 + $0x10] sm:$0xff]
        %v284 = vld [vmem:[%s2 + $0x18] sm:$0xff]
        %v285 = vld [vmem:[%s2 + $0x20] sm:$0xff]
        %v286 = vld [vmem:[%s2 + $0x28] sm:$0xff]
        %v287 = vld [vmem:[%s2 + $0x30] sm:$0xff]
        %v288 = vld [vmem:[%s2 + $0x38] sm:$0xff]
        %v289 = vld [vmem:[%s2 + $0x40] sm:$0xff]
        %v290 = vld [vmem:[%s2 + $0x48] sm:$0xff]
        %v291 = vld [vmem:[%s2 + $0x50] sm:$0xff]
        %v292 = vld [vmem:[%s2 + $0x58] sm:$0xff]
        %v293 = vld [vmem:[%s2 + $0x60] sm:$0xff]
        %v294 = vld [vmem:[%s2 + $0x68] sm:$0xff]
        %v295 = vld [vmem:[%s2 + $0x70] sm:$0xff]
        %v296 = vld [vmem:[%s2 + $0x78] sm:$0xff]
        %298 = vset.pattern.permute.xlu0 0
        %299 = vperm.xlu0 %298, %v281
        %v300 = vpop.permute.xlu0 %299
        %303 = vset.pattern.permute.xlu0 0
        %304 = vperm.xlu0 %303, %v282
        %v305 = vpop.permute.xlu0 %304
        %308 = vset.pattern.permute.xlu0 0
        %309 = vperm.xlu0 %308, %v283
        %v310 = vpop.permute.xlu0 %309
        %313 = vset.pattern.permute.xlu0 0
        %314 = vperm.xlu0 %313, %v284
        %v315 = vpop.permute.xlu0 %314
        %318 = vset.pattern.permute.xlu0 0
        %319 = vperm.xlu0 %318, %v285
        %v320 = vpop.permute.xlu0 %319
        %323 = vset.pattern.permute.xlu0 0
        %324 = vperm.xlu0 %323, %v286
        %v325 = vpop.permute.xlu0 %324
        %328 = vset.pattern.permute.xlu0 0
        %329 = vperm.xlu0 %328, %v287
        %v330 = vpop.permute.xlu0 %329
        %333 = vset.pattern.permute.xlu0 0
        %334 = vperm.xlu0 %333, %v288
        %v335 = vpop.permute.xlu0 %334
        %338 = vset.pattern.permute.xlu0 0
        %339 = vperm.xlu0 %338, %v289
        %v340 = vpop.permute.xlu0 %339
        %343 = vset.pattern.permute.xlu0 0
        %344 = vperm.xlu0 %343, %v290
        %v345 = vpop.permute.xlu0 %344
        %348 = vset.pattern.permute.xlu0 0
        %349 = vperm.xlu0 %348, %v291
        %v350 = vpop.permute.xlu0 %349
        %353 = vset.pattern.permute.xlu0 0
        %354 = vperm.xlu0 %353, %v292
        %v355 = vpop.permute.xlu0 %354
        %358 = vset.pattern.permute.xlu0 0
        %359 = vperm.xlu0 %358, %v293
        %v360 = vpop.permute.xlu0 %359
        %363 = vset.pattern.permute.xlu0 0
        %364 = vperm.xlu0 %363, %v294
        %v365 = vpop.permute.xlu0 %364
        %368 = vset.pattern.permute.xlu0 0
        %369 = vperm.xlu0 %368, %v295
        %v370 = vpop.permute.xlu0 %369
        %373 = vset.pattern.permute.xlu0 0
        %374 = vperm.xlu0 %373, %v296
        %v375 = vpop.permute.xlu0 %374
        %v393 = vunpack.c.l.b16 %v265
        %v394 = vunpack.c.l.b16 %v266
        %v395 = vunpack.c.l.b16 %v267
        %v396 = vunpack.c.l.b16 %v268
        %v397 = vunpack.c.l.b16 %v269
        %v398 = vunpack.c.l.b16 %v270
        %v399 = vunpack.c.l.b16 %v271
        %v400 = vunpack.c.l.b16 %v272
        %v401 = vunpack.c.l.b16 %v273
        %v402 = vunpack.c.l.b16 %v274
        %v403 = vunpack.c.l.b16 %v275
        %v404 = vunpack.c.l.b16 %v276
        %v405 = vunpack.c.l.b16 %v277
        %v406 = vunpack.c.l.b16 %v278
        %v407 = vunpack.c.l.b16 %v279
        %v408 = vunpack.c.l.b16 %v280
        %v409 = vpack.c.b16 %v394, %v393
        %v410 = vpack.c.b16 %v396, %v395
        %v411 = vpack.c.b16 %v398, %v397
        %v412 = vpack.c.b16 %v400, %v399
        %v413 = vpack.c.b16 %v402, %v401
        %v414 = vpack.c.b16 %v404, %v403
        %v415 = vpack.c.b16 %v406, %v405
        %v416 = vpack.c.b16 %v408, %v407
        %vm417 = vcmask 31744
        %v419 = vsel %vm417, %v409, 0
        %v422 = vsel %vm417, %v410, 0
        %v425 = vsel %vm417, %v411, 0
        %v428 = vsel %vm417, %v412, 0
        %v431 = vsel %vm417, %v413, 0
        %v434 = vsel %vm417, %v414, 0
        %v437 = vsel %vm417, %v415, 0
        %v440 = vsel %vm417, %v416, 0
        %vm442 = vcmask 1041408
        %v444 = vsel %vm442, %v263, 0
        %v447 = vsel %vm442, %v264, 0
        %449 = vmatpush.bf16.msra.mxu0 0
        %450 = vmatpush.bf16.msra.mxu0 0
        %451 = vmatpush.bf16.msra.mxu0 0
        %452 = vmatpush.bf16.msra.mxu0 0
        %453 = vmatpush.bf16.msra.mxu0 0
        %454 = vmatpush.bf16.msra.mxu0 0
        %455 = vmatpush.bf16.msra.mxu0 0
        %456 = vmatpush.bf16.msra.mxu0 %v444
        %457 = vmatmul.bf16.gmra.mxu0 %v419
        %v458 = vpop.f32.mrf.mxu0
        %v459 = vadd.f32 %v300, %v458
        %v460 = vpop.f32.mrf.mxu0
        %v461 = vadd.f32 %v305, %v460
        %462 = vmatmul.bf16.gmra.mxu0 %v422
        %v463 = vpop.f32.mrf.mxu0
        %v464 = vadd.f32 %v310, %v463
        %v465 = vpop.f32.mrf.mxu0
        %v466 = vadd.f32 %v315, %v465
        %467 = vmatmul.bf16.gmra.mxu0 %v425
        %v468 = vpop.f32.mrf.mxu0
        %v469 = vadd.f32 %v320, %v468
        %v470 = vpop.f32.mrf.mxu0
        %v471 = vadd.f32 %v325, %v470
        %472 = vmatmul.bf16.gmra.mxu0 %v428
        %v473 = vpop.f32.mrf.mxu0
        %v474 = vadd.f32 %v330, %v473
        %v475 = vpop.f32.mrf.mxu0
        %v476 = vadd.f32 %v335, %v475
        %477 = vmatmul.bf16.gmra.mxu0 %v431
        %v478 = vpop.f32.mrf.mxu0
        %v479 = vadd.f32 %v340, %v478
        %v480 = vpop.f32.mrf.mxu0
        %v481 = vadd.f32 %v345, %v480
        %482 = vmatmul.bf16.gmra.mxu0 %v434
        %v483 = vpop.f32.mrf.mxu0
        %v484 = vadd.f32 %v350, %v483
        %v485 = vpop.f32.mrf.mxu0
        %v486 = vadd.f32 %v355, %v485
        %487 = vmatmul.bf16.gmra.mxu0 %v437
        %v488 = vpop.f32.mrf.mxu0
        %v489 = vadd.f32 %v360, %v488
        %v490 = vpop.f32.mrf.mxu0
        %v491 = vadd.f32 %v365, %v490
        %492 = vmatmul.bf16.gmra.mxu0 %v440
        %v493 = vpop.f32.mrf.mxu0
        %v494 = vadd.f32 %v370, %v493
        %v495 = vpop.f32.mrf.mxu0
        %v496 = vadd.f32 %v375, %v495
        %497 = vdwg.mxu0
        %498 = vmatpush.bf16.msra.mxu0 0
        %499 = vmatpush.bf16.msra.mxu0 0
        %500 = vmatpush.bf16.msra.mxu0 0
        %501 = vmatpush.bf16.msra.mxu0 0
        %502 = vmatpush.bf16.msra.mxu0 0
        %503 = vmatpush.bf16.msra.mxu0 0
        %504 = vmatpush.bf16.msra.mxu0 0
        %505 = vmatpush.bf16.msra.mxu0 %v447
        %506 = vmatmul.bf16.gmra.mxu0 %v419
        %v507 = vpop.f32.mrf.mxu0
        %v508 = vadd.f32 %v300, %v507
        %v509 = vpop.f32.mrf.mxu0
        %v510 = vadd.f32 %v305, %v509
        %511 = vmatmul.bf16.gmra.mxu0 %v422
        %v512 = vpop.f32.mrf.mxu0
        %v513 = vadd.f32 %v310, %v512
        %v514 = vpop.f32.mrf.mxu0
        %v515 = vadd.f32 %v315, %v514
        %516 = vmatmul.bf16.gmra.mxu0 %v425
        %v517 = vpop.f32.mrf.mxu0
        %v518 = vadd.f32 %v320, %v517
        %v519 = vpop.f32.mrf.mxu0
        %v520 = vadd.f32 %v325, %v519
        %521 = vmatmul.bf16.gmra.mxu0 %v428
        %v522 = vpop.f32.mrf.mxu0
        %v523 = vadd.f32 %v330, %v522
        %v524 = vpop.f32.mrf.mxu0
        %v525 = vadd.f32 %v335, %v524
        %526 = vmatmul.bf16.gmra.mxu0 %v431
        %v527 = vpop.f32.mrf.mxu0
        %v528 = vadd.f32 %v340, %v527
        %v529 = vpop.f32.mrf.mxu0
        %v530 = vadd.f32 %v345, %v529
        %531 = vmatmul.bf16.gmra.mxu0 %v434
        %v532 = vpop.f32.mrf.mxu0
        %v533 = vadd.f32 %v350, %v532
        %v534 = vpop.f32.mrf.mxu0
        %v535 = vadd.f32 %v355, %v534
        %536 = vmatmul.bf16.gmra.mxu0 %v437
        %v537 = vpop.f32.mrf.mxu0
        %v538 = vadd.f32 %v360, %v537
        %v539 = vpop.f32.mrf.mxu0
        %v540 = vadd.f32 %v365, %v539
        %541 = vmatmul.bf16.gmra.mxu0 %v440
        %v542 = vpop.f32.mrf.mxu0
        %v543 = vadd.f32 %v370, %v542
        %v544 = vpop.f32.mrf.mxu0
        %v545 = vadd.f32 %v375, %v544
        %546 = vdwg.mxu0
        %v547 = vmax.f32 %v459, 0.0
        %v548 = vmax.f32 %v508, 0.0
        %v549 = vmax.f32 %v461, 0.0
        %v550 = vmax.f32 %v510, 0.0
        %v551 = vmax.f32 %v464, 0.0
        %v552 = vmax.f32 %v513, 0.0
        %v553 = vmax.f32 %v466, 0.0
        %v554 = vmax.f32 %v515, 0.0
        %v555 = vmax.f32 %v469, 0.0
        %v556 = vmax.f32 %v518, 0.0
        %v557 = vmax.f32 %v471, 0.0
        %v558 = vmax.f32 %v520, 0.0
        %v559 = vmax.f32 %v474, 0.0
        %v560 = vmax.f32 %v523, 0.0
        %v561 = vmax.f32 %v476, 0.0
        %v562 = vmax.f32 %v525, 0.0
        %v563 = vmax.f32 %v479, 0.0
        %v564 = vmax.f32 %v528, 0.0
        %v565 = vmax.f32 %v481, 0.0
        %v566 = vmax.f32 %v530, 0.0
        %v567 = vmax.f32 %v484, 0.0
        %v568 = vmax.f32 %v533, 0.0
        %v569 = vmax.f32 %v486, 0.0
        %v570 = vmax.f32 %v535, 0.0
        %v571 = vmax.f32 %v489, 0.0
        %v572 = vmax.f32 %v538, 0.0
        %v573 = vmax.f32 %v491, 0.0
        %v574 = vmax.f32 %v540, 0.0
        %v575 = vmax.f32 %v494, 0.0
        %v576 = vmax.f32 %v543, 0.0
        %v577 = vmax.f32 %v496, 0.0
        %v578 = vmax.f32 %v545, 0.0
        %v579 = vld [vmem:[%s3] sm:$0xff]
        %v580 = vld [vmem:[%s3 + $0x8] sm:$0xff]
        %v581 = vld [vmem:[%s3 + $0x10] sm:$0xff]
        %v582 = vld [vmem:[%s3 + $0x18] sm:$0xff]
        %v583 = vld [vmem:[%s3 + $0x20] sm:$0xff]
        %v584 = vld [vmem:[%s3 + $0x28] sm:$0xff]
        %v585 = vld [vmem:[%s3 + $0x30] sm:$0xff]
        %v586 = vld [vmem:[%s3 + $0x38] sm:$0xff]
        %v587 = vld [vmem:[%s3 + $0x40] sm:$0xff]
        %v588 = vld [vmem:[%s3 + $0x48] sm:$0xff]
        %v589 = vld [vmem:[%s3 + $0x50] sm:$0xff]
        %v590 = vld [vmem:[%s3 + $0x58] sm:$0xff]
        %v591 = vld [vmem:[%s3 + $0x60] sm:$0xff]
        %v592 = vld [vmem:[%s3 + $0x68] sm:$0xff]
        %v593 = vld [vmem:[%s3 + $0x70] sm:$0xff]
        %v594 = vld [vmem:[%s3 + $0x78] sm:$0xff]
        %596 = vset.pattern.permute.xlu0 0
        %597 = vperm.xlu0 %596, %v579
        %v598 = vpop.permute.xlu0 %597
        %601 = vset.pattern.permute.xlu0 0
        %602 = vperm.xlu0 %601, %v580
        %v603 = vpop.permute.xlu0 %602
        %606 = vset.pattern.permute.xlu0 0
        %607 = vperm.xlu0 %606, %v581
        %v608 = vpop.permute.xlu0 %607
        %611 = vset.pattern.permute.xlu0 0
        %612 = vperm.xlu0 %611, %v582
        %v613 = vpop.permute.xlu0 %612
        %616 = vset.pattern.permute.xlu0 0
        %617 = vperm.xlu0 %616, %v583
        %v618 = vpop.permute.xlu0 %617
        %621 = vset.pattern.permute.xlu0 0
        %622 = vperm.xlu0 %621, %v584
        %v623 = vpop.permute.xlu0 %622
        %626 = vset.pattern.permute.xlu0 0
        %627 = vperm.xlu0 %626, %v585
        %v628 = vpop.permute.xlu0 %627
        %631 = vset.pattern.permute.xlu0 0
        %632 = vperm.xlu0 %631, %v586
        %v633 = vpop.permute.xlu0 %632
        %636 = vset.pattern.permute.xlu0 0
        %637 = vperm.xlu0 %636, %v587
        %v638 = vpop.permute.xlu0 %637
        %641 = vset.pattern.permute.xlu0 0
        %642 = vperm.xlu0 %641, %v588
        %v643 = vpop.permute.xlu0 %642
        %646 = vset.pattern.permute.xlu0 0
        %647 = vperm.xlu0 %646, %v589
        %v648 = vpop.permute.xlu0 %647
        %651 = vset.pattern.permute.xlu0 0
        %652 = vperm.xlu0 %651, %v590
        %v653 = vpop.permute.xlu0 %652
        %656 = vset.pattern.permute.xlu0 0
        %657 = vperm.xlu0 %656, %v591
        %v658 = vpop.permute.xlu0 %657
        %661 = vset.pattern.permute.xlu0 0
        %662 = vperm.xlu0 %661, %v592
        %v663 = vpop.permute.xlu0 %662
        %666 = vset.pattern.permute.xlu0 0
        %667 = vperm.xlu0 %666, %v593
        %v668 = vpop.permute.xlu0 %667
        %671 = vset.pattern.permute.xlu0 0
        %672 = vperm.xlu0 %671, %v594
        %v673 = vpop.permute.xlu0 %672
        %v675 = vmul.f32 %v547, %v598
        %v676 = vmul.f32 %v548, %v598
        %v677 = vmul.f32 %v549, %v603
        %v678 = vmul.f32 %v550, %v603
        %v679 = vmul.f32 %v551, %v608
        %v680 = vmul.f32 %v552, %v608
        %v681 = vmul.f32 %v553, %v613
        %v682 = vmul.f32 %v554, %v613
        %v683 = vmul.f32 %v555, %v618
        %v684 = vmul.f32 %v556, %v618
        %v685 = vmul.f32 %v557, %v623
        %v686 = vmul.f32 %v558, %v623
        %v687 = vmul.f32 %v559, %v628
        %v688 = vmul.f32 %v560, %v628
        %v689 = vmul.f32 %v561, %v633
        %v690 = vmul.f32 %v562, %v633
        %v691 = vmul.f32 %v563, %v638
        %v692 = vmul.f32 %v564, %v638
        %v693 = vmul.f32 %v565, %v643
        %v694 = vmul.f32 %v566, %v643
        %v695 = vmul.f32 %v567, %v648
        %v696 = vmul.f32 %v568, %v648
        %v697 = vmul.f32 %v569, %v653
        %v698 = vmul.f32 %v570, %v653
        %v699 = vmul.f32 %v571, %v658
        %v700 = vmul.f32 %v572, %v658
        %v701 = vmul.f32 %v573, %v663
        %v702 = vmul.f32 %v574, %v663
        %v703 = vmul.f32 %v575, %v668
        %v704 = vmul.f32 %v576, %v668
        %v705 = vmul.f32 %v577, %v673
        %v706 = vmul.f32 %v578, %v673
        %v707 = vadd.f32 %v675, %v677
        %v708 = vadd.f32 %v707, %v679
        %v709 = vadd.f32 %v708, %v681
        %v710 = vadd.f32 %v709, %v683
        %v711 = vadd.f32 %v710, %v685
        %v712 = vadd.f32 %v711, %v687
        %v713 = vadd.f32 %v712, %v689
        %v714 = vadd.f32 %v713, %v691
        %v715 = vadd.f32 %v714, %v693
        %v716 = vadd.f32 %v715, %v695
        %v717 = vadd.f32 %v716, %v697
        %v718 = vadd.f32 %v717, %v699
        %v719 = vadd.f32 %v718, %v701
        %v720 = vadd.f32 %v719, %v703
        %v721 = vadd.f32 %v720, %v705
        %v722 = vrot.slane %v721, 4
        %v723 = vadd.f32 %v721, %v722
        %v724 = vrot.slane %v723, 2
        %v725 = vadd.f32 %v723, %v724
        %v726 = vrot.slane %v725, 1
        %v727 = vadd.f32 %v725, %v726
        %v728 = vadd.f32 %v676, %v678
        %v729 = vadd.f32 %v728, %v680
        %v730 = vadd.f32 %v729, %v682
        %v731 = vadd.f32 %v730, %v684
        %v732 = vadd.f32 %v731, %v686
        %v733 = vadd.f32 %v732, %v688
        %v734 = vadd.f32 %v733, %v690
        %v735 = vadd.f32 %v734, %v692
        %v736 = vadd.f32 %v735, %v694
        %v737 = vadd.f32 %v736, %v696
        %v738 = vadd.f32 %v737, %v698
        %v739 = vadd.f32 %v738, %v700
        %v740 = vadd.f32 %v739, %v702
        %v741 = vadd.f32 %v740, %v704
        %v742 = vadd.f32 %v741, %v706
        %v743 = vrot.slane %v742, 4
        %v744 = vadd.f32 %v742, %v743
        %v745 = vrot.slane %v744, 2
        %v746 = vadd.f32 %v744, %v745
        %v747 = vrot.slane %v746, 1
        %v748 = vadd.f32 %v746, %v747
        %v749 = vadd.f32 %v727, 0.0
        %v750 = vadd.f32 %v748, 0.0
        %v751 = vld [vmem:[%s1 + $0x40] sm:$0xf]
        %v752 = vld [vmem:[%s1 + $0x44] sm:$0xf]
        %v753 = vld [vmem:[%s1 + $0x48] sm:$0xf]
        %v754 = vld [vmem:[%s1 + $0x4c] sm:$0xf]
        %v755 = vld [vmem:[%s1 + $0x50] sm:$0xf]
        %v756 = vld [vmem:[%s1 + $0x54] sm:$0xf]
        %v757 = vld [vmem:[%s1 + $0x58] sm:$0xf]
        %v758 = vld [vmem:[%s1 + $0x5c] sm:$0xf]
        %v759 = vld [vmem:[%s1 + $0x60] sm:$0xf]
        %v760 = vld [vmem:[%s1 + $0x64] sm:$0xf]
        %v761 = vld [vmem:[%s1 + $0x68] sm:$0xf]
        %v762 = vld [vmem:[%s1 + $0x6c] sm:$0xf]
        %v763 = vld [vmem:[%s1 + $0x70] sm:$0xf]
        %v764 = vld [vmem:[%s1 + $0x74] sm:$0xf]
        %v765 = vld [vmem:[%s1 + $0x78] sm:$0xf]
        %v766 = vld [vmem:[%s1 + $0x7c] sm:$0xf]
        %v767 = vld [vmem:[%s2 + $0x80] sm:$0xff]
        %v768 = vld [vmem:[%s2 + $0x88] sm:$0xff]
        %v769 = vld [vmem:[%s2 + $0x90] sm:$0xff]
        %v770 = vld [vmem:[%s2 + $0x98] sm:$0xff]
        %v771 = vld [vmem:[%s2 + $0xa0] sm:$0xff]
        %v772 = vld [vmem:[%s2 + $0xa8] sm:$0xff]
        %v773 = vld [vmem:[%s2 + $0xb0] sm:$0xff]
        %v774 = vld [vmem:[%s2 + $0xb8] sm:$0xff]
        %v775 = vld [vmem:[%s2 + $0xc0] sm:$0xff]
        %v776 = vld [vmem:[%s2 + $0xc8] sm:$0xff]
        %v777 = vld [vmem:[%s2 + $0xd0] sm:$0xff]
        %v778 = vld [vmem:[%s2 + $0xd8] sm:$0xff]
        %v779 = vld [vmem:[%s2 + $0xe0] sm:$0xff]
        %v780 = vld [vmem:[%s2 + $0xe8] sm:$0xff]
        %v781 = vld [vmem:[%s2 + $0xf0] sm:$0xff]
        %v782 = vld [vmem:[%s2 + $0xf8] sm:$0xff]
        %784 = vset.pattern.permute.xlu0 0
        %785 = vperm.xlu0 %784, %v767
        %v786 = vpop.permute.xlu0 %785
        %789 = vset.pattern.permute.xlu0 0
        %790 = vperm.xlu0 %789, %v768
        %v791 = vpop.permute.xlu0 %790
        %794 = vset.pattern.permute.xlu0 0
        %795 = vperm.xlu0 %794, %v769
        %v796 = vpop.permute.xlu0 %795
        %799 = vset.pattern.permute.xlu0 0
        %800 = vperm.xlu0 %799, %v770
        %v801 = vpop.permute.xlu0 %800
        %804 = vset.pattern.permute.xlu0 0
        %805 = vperm.xlu0 %804, %v771
        %v806 = vpop.permute.xlu0 %805
        %809 = vset.pattern.permute.xlu0 0
        %810 = vperm.xlu0 %809, %v772
        %v811 = vpop.permute.xlu0 %810
        %814 = vset.pattern.permute.xlu0 0
        %815 = vperm.xlu0 %814, %v773
        %v816 = vpop.permute.xlu0 %815
        %819 = vset.pattern.permute.xlu0 0
        %820 = vperm.xlu0 %819, %v774
        %v821 = vpop.permute.xlu0 %820
        %824 = vset.pattern.permute.xlu0 0
        %825 = vperm.xlu0 %824, %v775
        %v826 = vpop.permute.xlu0 %825
        %829 = vset.pattern.permute.xlu0 0
        %830 = vperm.xlu0 %829, %v776
        %v831 = vpop.permute.xlu0 %830
        %834 = vset.pattern.permute.xlu0 0
        %835 = vperm.xlu0 %834, %v777
        %v836 = vpop.permute.xlu0 %835
        %839 = vset.pattern.permute.xlu0 0
        %840 = vperm.xlu0 %839, %v778
        %v841 = vpop.permute.xlu0 %840
        %844 = vset.pattern.permute.xlu0 0
        %845 = vperm.xlu0 %844, %v779
        %v846 = vpop.permute.xlu0 %845
        %849 = vset.pattern.permute.xlu0 0
        %850 = vperm.xlu0 %849, %v780
        %v851 = vpop.permute.xlu0 %850
        %854 = vset.pattern.permute.xlu0 0
        %855 = vperm.xlu0 %854, %v781
        %v856 = vpop.permute.xlu0 %855
        %859 = vset.pattern.permute.xlu0 0
        %860 = vperm.xlu0 %859, %v782
        %v861 = vpop.permute.xlu0 %860
        %v879 = vunpack.c.l.b16 %v751
        %v880 = vunpack.c.l.b16 %v752
        %v881 = vunpack.c.l.b16 %v753
        %v882 = vunpack.c.l.b16 %v754
        %v883 = vunpack.c.l.b16 %v755
        %v884 = vunpack.c.l.b16 %v756
        %v885 = vunpack.c.l.b16 %v757
        %v886 = vunpack.c.l.b16 %v758
        %v887 = vunpack.c.l.b16 %v759
        %v888 = vunpack.c.l.b16 %v760
        %v889 = vunpack.c.l.b16 %v761
        %v890 = vunpack.c.l.b16 %v762
        %v891 = vunpack.c.l.b16 %v763
        %v892 = vunpack.c.l.b16 %v764
        %v893 = vunpack.c.l.b16 %v765
        %v894 = vunpack.c.l.b16 %v766
        %v895 = vpack.c.b16 %v880, %v879
        %v896 = vpack.c.b16 %v882, %v881
        %v897 = vpack.c.b16 %v884, %v883
        %v898 = vpack.c.b16 %v886, %v885
        %v899 = vpack.c.b16 %v888, %v887
        %v900 = vpack.c.b16 %v890, %v889
        %v901 = vpack.c.b16 %v892, %v891
        %v902 = vpack.c.b16 %v894, %v893
        %v904 = vsel %vm417, %v895, 0
        %v907 = vsel %vm417, %v896, 0
        %v910 = vsel %vm417, %v897, 0
        %v913 = vsel %vm417, %v898, 0
        %v916 = vsel %vm417, %v899, 0
        %v919 = vsel %vm417, %v900, 0
        %v922 = vsel %vm417, %v901, 0
        %v925 = vsel %vm417, %v902, 0
        %927 = vmatpush.bf16.msra.mxu0 0
        %928 = vmatpush.bf16.msra.mxu0 0
        %929 = vmatpush.bf16.msra.mxu0 0
        %930 = vmatpush.bf16.msra.mxu0 0
        %931 = vmatpush.bf16.msra.mxu0 0
        %932 = vmatpush.bf16.msra.mxu0 0
        %933 = vmatpush.bf16.msra.mxu0 0
        %934 = vmatpush.bf16.msra.mxu0 %v444
        %935 = vmatmul.bf16.gmra.mxu0 %v904
        %v936 = vpop.f32.mrf.mxu0
        %v937 = vadd.f32 %v786, %v936
        %v938 = vpop.f32.mrf.mxu0
        %v939 = vadd.f32 %v791, %v938
        %940 = vmatmul.bf16.gmra.mxu0 %v907
        %v941 = vpop.f32.mrf.mxu0
        %v942 = vadd.f32 %v796, %v941
        %v943 = vpop.f32.mrf.mxu0
        %v944 = vadd.f32 %v801, %v943
        %945 = vmatmul.bf16.gmra.mxu0 %v910
        %v946 = vpop.f32.mrf.mxu0
        %v947 = vadd.f32 %v806, %v946
        %v948 = vpop.f32.mrf.mxu0
        %v949 = vadd.f32 %v811, %v948
        %950 = vmatmul.bf16.gmra.mxu0 %v913
        %v951 = vpop.f32.mrf.mxu0
        %v952 = vadd.f32 %v816, %v951
        %v953 = vpop.f32.mrf.mxu0
        %v954 = vadd.f32 %v821, %v953
        %955 = vmatmul.bf16.gmra.mxu0 %v916
        %v956 = vpop.f32.mrf.mxu0
        %v957 = vadd.f32 %v826, %v956
        %v958 = vpop.f32.mrf.mxu0
        %v959 = vadd.f32 %v831, %v958
        %960 = vmatmul.bf16.gmra.mxu0 %v919
        %v961 = vpop.f32.mrf.mxu0
        %v962 = vadd.f32 %v836, %v961
        %v963 = vpop.f32.mrf.mxu0
        %v964 = vadd.f32 %v841, %v963
        %965 = vmatmul.bf16.gmra.mxu0 %v922
        %v966 = vpop.f32.mrf.mxu0
        %v967 = vadd.f32 %v846, %v966
        %v968 = vpop.f32.mrf.mxu0
        %v969 = vadd.f32 %v851, %v968
        %970 = vmatmul.bf16.gmra.mxu0 %v925
        %v971 = vpop.f32.mrf.mxu0
        %v972 = vadd.f32 %v856, %v971
        %v973 = vpop.f32.mrf.mxu0
        %v974 = vadd.f32 %v861, %v973
        %975 = vdwg.mxu0
        %976 = vmatpush.bf16.msra.mxu0 0
        %977 = vmatpush.bf16.msra.mxu0 0
        %978 = vmatpush.bf16.msra.mxu0 0
        %979 = vmatpush.bf16.msra.mxu0 0
        %980 = vmatpush.bf16.msra.mxu0 0
        %981 = vmatpush.bf16.msra.mxu0 0
        %982 = vmatpush.bf16.msra.mxu0 0
        %983 = vmatpush.bf16.msra.mxu0 %v447
        %984 = vmatmul.bf16.gmra.mxu0 %v904
        %v985 = vpop.f32.mrf.mxu0
        %v986 = vadd.f32 %v786, %v985
        %v987 = vpop.f32.mrf.mxu0
        %v988 = vadd.f32 %v791, %v987
        %989 = vmatmul.bf16.gmra.mxu0 %v907
        %v990 = vpop.f32.mrf.mxu0
        %v991 = vadd.f32 %v796, %v990
        %v992 = vpop.f32.mrf.mxu0
        %v993 = vadd.f32 %v801, %v992
        %994 = vmatmul.bf16.gmra.mxu0 %v910
        %v995 = vpop.f32.mrf.mxu0
        %v996 = vadd.f32 %v806, %v995
        %v997 = vpop.f32.mrf.mxu0
        %v998 = vadd.f32 %v811, %v997
        %999 = vmatmul.bf16.gmra.mxu0 %v913
        %v1000 = vpop.f32.mrf.mxu0
        %v1001 = vadd.f32 %v816, %v1000
        %v1002 = vpop.f32.mrf.mxu0
        %v1003 = vadd.f32 %v821, %v1002
        %1004 = vmatmul.bf16.gmra.mxu0 %v916
        %v1005 = vpop.f32.mrf.mxu0
        %v1006 = vadd.f32 %v826, %v1005
        %v1007 = vpop.f32.mrf.mxu0
        %v1008 = vadd.f32 %v831, %v1007
        %1009 = vmatmul.bf16.gmra.mxu0 %v919
        %v1010 = vpop.f32.mrf.mxu0
        %v1011 = vadd.f32 %v836, %v1010
        %v1012 = vpop.f32.mrf.mxu0
        %v1013 = vadd.f32 %v841, %v1012
        %1014 = vmatmul.bf16.gmra.mxu0 %v922
        %v1015 = vpop.f32.mrf.mxu0
        %v1016 = vadd.f32 %v846, %v1015
        %v1017 = vpop.f32.mrf.mxu0
        %v1018 = vadd.f32 %v851, %v1017
        %1019 = vmatmul.bf16.gmra.mxu0 %v925
        %v1020 = vpop.f32.mrf.mxu0
        %v1021 = vadd.f32 %v856, %v1020
        %v1022 = vpop.f32.mrf.mxu0
        %v1023 = vadd.f32 %v861, %v1022
        %1024 = vdwg.mxu0
        %v1025 = vmax.f32 %v937, 0.0
        %v1026 = vmax.f32 %v986, 0.0
        %v1027 = vmax.f32 %v939, 0.0
        %v1028 = vmax.f32 %v988, 0.0
        %v1029 = vmax.f32 %v942, 0.0
        %v1030 = vmax.f32 %v991, 0.0
        %v1031 = vmax.f32 %v944, 0.0
        %v1032 = vmax.f32 %v993, 0.0
        %v1033 = vmax.f32 %v947, 0.0
        %v1034 = vmax.f32 %v996, 0.0
        %v1035 = vmax.f32 %v949, 0.0
        %v1036 = vmax.f32 %v998, 0.0
        %v1037 = vmax.f32 %v952, 0.0
        %v1038 = vmax.f32 %v1001, 0.0
        %v1039 = vmax.f32 %v954, 0.0
        %v1040 = vmax.f32 %v1003, 0.0
        %v1041 = vmax.f32 %v957, 0.0
        %v1042 = vmax.f32 %v1006, 0.0
        %v1043 = vmax.f32 %v959, 0.0
        %v1044 = vmax.f32 %v1008, 0.0
        %v1045 = vmax.f32 %v962, 0.0
        %v1046 = vmax.f32 %v1011, 0.0
        %v1047 = vmax.f32 %v964, 0.0
        %v1048 = vmax.f32 %v1013, 0.0
        %v1049 = vmax.f32 %v967, 0.0
        %v1050 = vmax.f32 %v1016, 0.0
        %v1051 = vmax.f32 %v969, 0.0
        %v1052 = vmax.f32 %v1018, 0.0
        %v1053 = vmax.f32 %v972, 0.0
        %v1054 = vmax.f32 %v1021, 0.0
        %v1055 = vmax.f32 %v974, 0.0
        %v1056 = vmax.f32 %v1023, 0.0
        %v1057 = vld [vmem:[%s3 + $0x80] sm:$0xff]
        %v1058 = vld [vmem:[%s3 + $0x88] sm:$0xff]
        %v1059 = vld [vmem:[%s3 + $0x90] sm:$0xff]
        %v1060 = vld [vmem:[%s3 + $0x98] sm:$0xff]
        %v1061 = vld [vmem:[%s3 + $0xa0] sm:$0xff]
        %v1062 = vld [vmem:[%s3 + $0xa8] sm:$0xff]
        %v1063 = vld [vmem:[%s3 + $0xb0] sm:$0xff]
        %v1064 = vld [vmem:[%s3 + $0xb8] sm:$0xff]
        %v1065 = vld [vmem:[%s3 + $0xc0] sm:$0xff]
        %v1066 = vld [vmem:[%s3 + $0xc8] sm:$0xff]
        %v1067 = vld [vmem:[%s3 + $0xd0] sm:$0xff]
        %v1068 = vld [vmem:[%s3 + $0xd8] sm:$0xff]
        %v1069 = vld [vmem:[%s3 + $0xe0] sm:$0xff]
        %v1070 = vld [vmem:[%s3 + $0xe8] sm:$0xff]
        %v1071 = vld [vmem:[%s3 + $0xf0] sm:$0xff]
        %v1072 = vld [vmem:[%s3 + $0xf8] sm:$0xff]
        %1074 = vset.pattern.permute.xlu0 0
        %1075 = vperm.xlu0 %1074, %v1057
        %v1076 = vpop.permute.xlu0 %1075
        %1079 = vset.pattern.permute.xlu0 0
        %1080 = vperm.xlu0 %1079, %v1058
        %v1081 = vpop.permute.xlu0 %1080
        %1084 = vset.pattern.permute.xlu0 0
        %1085 = vperm.xlu0 %1084, %v1059
        %v1086 = vpop.permute.xlu0 %1085
        %1089 = vset.pattern.permute.xlu0 0
        %1090 = vperm.xlu0 %1089, %v1060
        %v1091 = vpop.permute.xlu0 %1090
        %1094 = vset.pattern.permute.xlu0 0
        %1095 = vperm.xlu0 %1094, %v1061
        %v1096 = vpop.permute.xlu0 %1095
        %1099 = vset.pattern.permute.xlu0 0
        %1100 = vperm.xlu0 %1099, %v1062
        %v1101 = vpop.permute.xlu0 %1100
        %1104 = vset.pattern.permute.xlu0 0
        %1105 = vperm.xlu0 %1104, %v1063
        %v1106 = vpop.permute.xlu0 %1105
        %1109 = vset.pattern.permute.xlu0 0
        %1110 = vperm.xlu0 %1109, %v1064
        %v1111 = vpop.permute.xlu0 %1110
        %1114 = vset.pattern.permute.xlu0 0
        %1115 = vperm.xlu0 %1114, %v1065
        %v1116 = vpop.permute.xlu0 %1115
        %1119 = vset.pattern.permute.xlu0 0
        %1120 = vperm.xlu0 %1119, %v1066
        %v1121 = vpop.permute.xlu0 %1120
        %1124 = vset.pattern.permute.xlu0 0
        %1125 = vperm.xlu0 %1124, %v1067
        %v1126 = vpop.permute.xlu0 %1125
        %1129 = vset.pattern.permute.xlu0 0
        %1130 = vperm.xlu0 %1129, %v1068
        %v1131 = vpop.permute.xlu0 %1130
        %1134 = vset.pattern.permute.xlu0 0
        %1135 = vperm.xlu0 %1134, %v1069
        %v1136 = vpop.permute.xlu0 %1135
        %1139 = vset.pattern.permute.xlu0 0
        %1140 = vperm.xlu0 %1139, %v1070
        %v1141 = vpop.permute.xlu0 %1140
        %1144 = vset.pattern.permute.xlu0 0
        %1145 = vperm.xlu0 %1144, %v1071
        %v1146 = vpop.permute.xlu0 %1145
        %1149 = vset.pattern.permute.xlu0 0
        %1150 = vperm.xlu0 %1149, %v1072
        %v1151 = vpop.permute.xlu0 %1150
        %v1153 = vmul.f32 %v1025, %v1076
        %v1154 = vmul.f32 %v1026, %v1076
        %v1155 = vmul.f32 %v1027, %v1081
        %v1156 = vmul.f32 %v1028, %v1081
        %v1157 = vmul.f32 %v1029, %v1086
        %v1158 = vmul.f32 %v1030, %v1086
        %v1159 = vmul.f32 %v1031, %v1091
        %v1160 = vmul.f32 %v1032, %v1091
        %v1161 = vmul.f32 %v1033, %v1096
        %v1162 = vmul.f32 %v1034, %v1096
        %v1163 = vmul.f32 %v1035, %v1101
        %v1164 = vmul.f32 %v1036, %v1101
        %v1165 = vmul.f32 %v1037, %v1106
        %v1166 = vmul.f32 %v1038, %v1106
        %v1167 = vmul.f32 %v1039, %v1111
        %v1168 = vmul.f32 %v1040, %v1111
        %v1169 = vmul.f32 %v1041, %v1116
        %v1170 = vmul.f32 %v1042, %v1116
        %v1171 = vmul.f32 %v1043, %v1121
        %v1172 = vmul.f32 %v1044, %v1121
        %v1173 = vmul.f32 %v1045, %v1126
        %v1174 = vmul.f32 %v1046, %v1126
        %v1175 = vmul.f32 %v1047, %v1131
        %v1176 = vmul.f32 %v1048, %v1131
        %v1177 = vmul.f32 %v1049, %v1136
        %v1178 = vmul.f32 %v1050, %v1136
        %v1179 = vmul.f32 %v1051, %v1141
        %v1180 = vmul.f32 %v1052, %v1141
        %v1181 = vmul.f32 %v1053, %v1146
        %v1182 = vmul.f32 %v1054, %v1146
        %v1183 = vmul.f32 %v1055, %v1151
        %v1184 = vmul.f32 %v1056, %v1151
        %v1185 = vadd.f32 %v1153, %v1155
        %v1186 = vadd.f32 %v1185, %v1157
        %v1187 = vadd.f32 %v1186, %v1159
        %v1188 = vadd.f32 %v1187, %v1161
        %v1189 = vadd.f32 %v1188, %v1163
        %v1190 = vadd.f32 %v1189, %v1165
        %v1191 = vadd.f32 %v1190, %v1167
        %v1192 = vadd.f32 %v1191, %v1169
        %v1193 = vadd.f32 %v1192, %v1171
        %v1194 = vadd.f32 %v1193, %v1173
        %v1195 = vadd.f32 %v1194, %v1175
        %v1196 = vadd.f32 %v1195, %v1177
        %v1197 = vadd.f32 %v1196, %v1179
        %v1198 = vadd.f32 %v1197, %v1181
        %v1199 = vadd.f32 %v1198, %v1183
        %v1200 = vrot.slane %v1199, 4
        %v1201 = vadd.f32 %v1199, %v1200
        %v1202 = vrot.slane %v1201, 2
        %v1203 = vadd.f32 %v1201, %v1202
        %v1204 = vrot.slane %v1203, 1
        %v1205 = vadd.f32 %v1203, %v1204
        %v1206 = vadd.f32 %v1154, %v1156
        %v1207 = vadd.f32 %v1206, %v1158
        %v1208 = vadd.f32 %v1207, %v1160
        %v1209 = vadd.f32 %v1208, %v1162
        %v1210 = vadd.f32 %v1209, %v1164
        %v1211 = vadd.f32 %v1210, %v1166
        %v1212 = vadd.f32 %v1211, %v1168
        %v1213 = vadd.f32 %v1212, %v1170
        %v1214 = vadd.f32 %v1213, %v1172
        %v1215 = vadd.f32 %v1214, %v1174
        %v1216 = vadd.f32 %v1215, %v1176
        %v1217 = vadd.f32 %v1216, %v1178
        %v1218 = vadd.f32 %v1217, %v1180
        %v1219 = vadd.f32 %v1218, %v1182
        %v1220 = vadd.f32 %v1219, %v1184
        %v1221 = vrot.slane %v1220, 4
        %v1222 = vadd.f32 %v1220, %v1221
        %v1223 = vrot.slane %v1222, 2
        %v1224 = vadd.f32 %v1222, %v1223
        %v1225 = vrot.slane %v1224, 1
        %v1226 = vadd.f32 %v1224, %v1225
        %v1227 = vadd.f32 %v749, %v1205
        %v1228 = vadd.f32 %v750, %v1226
        %v1229 = vld [vmem:[%s1 + $0x80] sm:$0xf]
        %v1230 = vld [vmem:[%s1 + $0x84] sm:$0xf]
        %v1231 = vld [vmem:[%s1 + $0x88] sm:$0xf]
        %v1232 = vld [vmem:[%s1 + $0x8c] sm:$0xf]
        %v1233 = vld [vmem:[%s1 + $0x90] sm:$0xf]
        %v1234 = vld [vmem:[%s1 + $0x94] sm:$0xf]
        %v1235 = vld [vmem:[%s1 + $0x98] sm:$0xf]
        %v1236 = vld [vmem:[%s1 + $0x9c] sm:$0xf]
        %v1237 = vld [vmem:[%s1 + $0xa0] sm:$0xf]
        %v1238 = vld [vmem:[%s1 + $0xa4] sm:$0xf]
        %v1239 = vld [vmem:[%s1 + $0xa8] sm:$0xf]
        %v1240 = vld [vmem:[%s1 + $0xac] sm:$0xf]
        %v1241 = vld [vmem:[%s1 + $0xb0] sm:$0xf]
        %v1242 = vld [vmem:[%s1 + $0xb4] sm:$0xf]
        %v1243 = vld [vmem:[%s1 + $0xb8] sm:$0xf]
        %v1244 = vld [vmem:[%s1 + $0xbc] sm:$0xf]
        %v1245 = vld [vmem:[%s2 + $0x100] sm:$0xff]
        %v1246 = vld [vmem:[%s2 + $0x108] sm:$0xff]
        %v1247 = vld [vmem:[%s2 + $0x110] sm:$0xff]
        %v1248 = vld [vmem:[%s2 + $0x118] sm:$0xff]
        %v1249 = vld [vmem:[%s2 + $0x120] sm:$0xff]
        %v1250 = vld [vmem:[%s2 + $0x128] sm:$0xff]
        %v1251 = vld [vmem:[%s2 + $0x130] sm:$0xff]
        %v1252 = vld [vmem:[%s2 + $0x138] sm:$0xff]
        %v1253 = vld [vmem:[%s2 + $0x140] sm:$0xff]
        %v1254 = vld [vmem:[%s2 + $0x148] sm:$0xff]
        %v1255 = vld [vmem:[%s2 + $0x150] sm:$0xff]
        %v1256 = vld [vmem:[%s2 + $0x158] sm:$0xff]
        %v1257 = vld [vmem:[%s2 + $0x160] sm:$0xff]
        %v1258 = vld [vmem:[%s2 + $0x168] sm:$0xff]
        %v1259 = vld [vmem:[%s2 + $0x170] sm:$0xff]
        %v1260 = vld [vmem:[%s2 + $0x178] sm:$0xff]
        %1262 = vset.pattern.permute.xlu0 0
        %1263 = vperm.xlu0 %1262, %v1245
        %v1264 = vpop.permute.xlu0 %1263
        %1267 = vset.pattern.permute.xlu0 0
        %1268 = vperm.xlu0 %1267, %v1246
        %v1269 = vpop.permute.xlu0 %1268
        %1272 = vset.pattern.permute.xlu0 0
        %1273 = vperm.xlu0 %1272, %v1247
        %v1274 = vpop.permute.xlu0 %1273
        %1277 = vset.pattern.permute.xlu0 0
        %1278 = vperm.xlu0 %1277, %v1248
        %v1279 = vpop.permute.xlu0 %1278
        %1282 = vset.pattern.permute.xlu0 0
        %1283 = vperm.xlu0 %1282, %v1249
        %v1284 = vpop.permute.xlu0 %1283
        %1287 = vset.pattern.permute.xlu0 0
        %1288 = vperm.xlu0 %1287, %v1250
        %v1289 = vpop.permute.xlu0 %1288
        %1292 = vset.pattern.permute.xlu0 0
        %1293 = vperm.xlu0 %1292, %v1251
        %v1294 = vpop.permute.xlu0 %1293
        %1297 = vset.pattern.permute.xlu0 0
        %1298 = vperm.xlu0 %1297, %v1252
        %v1299 = vpop.permute.xlu0 %1298
        %1302 = vset.pattern.permute.xlu0 0
        %1303 = vperm.xlu0 %1302, %v1253
        %v1304 = vpop.permute.xlu0 %1303
        %1307 = vset.pattern.permute.xlu0 0
        %1308 = vperm.xlu0 %1307, %v1254
        %v1309 = vpop.permute.xlu0 %1308
        %1312 = vset.pattern.permute.xlu0 0
        %1313 = vperm.xlu0 %1312, %v1255
        %v1314 = vpop.permute.xlu0 %1313
        %1317 = vset.pattern.permute.xlu0 0
        %1318 = vperm.xlu0 %1317, %v1256
        %v1319 = vpop.permute.xlu0 %1318
        %1322 = vset.pattern.permute.xlu0 0
        %1323 = vperm.xlu0 %1322, %v1257
        %v1324 = vpop.permute.xlu0 %1323
        %1327 = vset.pattern.permute.xlu0 0
        %1328 = vperm.xlu0 %1327, %v1258
        %v1329 = vpop.permute.xlu0 %1328
        %1332 = vset.pattern.permute.xlu0 0
        %1333 = vperm.xlu0 %1332, %v1259
        %v1334 = vpop.permute.xlu0 %1333
        %1337 = vset.pattern.permute.xlu0 0
        %1338 = vperm.xlu0 %1337, %v1260
        %v1339 = vpop.permute.xlu0 %1338
        %v1357 = vunpack.c.l.b16 %v1229
        %v1358 = vunpack.c.l.b16 %v1230
        %v1359 = vunpack.c.l.b16 %v1231
        %v1360 = vunpack.c.l.b16 %v1232
        %v1361 = vunpack.c.l.b16 %v1233
        %v1362 = vunpack.c.l.b16 %v1234
        %v1363 = vunpack.c.l.b16 %v1235
        %v1364 = vunpack.c.l.b16 %v1236
        %v1365 = vunpack.c.l.b16 %v1237
        %v1366 = vunpack.c.l.b16 %v1238
        %v1367 = vunpack.c.l.b16 %v1239
        %v1368 = vunpack.c.l.b16 %v1240
        %v1369 = vunpack.c.l.b16 %v1241
        %v1370 = vunpack.c.l.b16 %v1242
        %v1371 = vunpack.c.l.b16 %v1243
        %v1372 = vunpack.c.l.b16 %v1244
        %v1373 = vpack.c.b16 %v1358, %v1357
        %v1374 = vpack.c.b16 %v1360, %v1359
        %v1375 = vpack.c.b16 %v1362, %v1361
        %v1376 = vpack.c.b16 %v1364, %v1363
        %v1377 = vpack.c.b16 %v1366, %v1365
        %v1378 = vpack.c.b16 %v1368, %v1367
        %v1379 = vpack.c.b16 %v1370, %v1369
        %v1380 = vpack.c.b16 %v1372, %v1371
        %v1382 = vsel %vm417, %v1373, 0
        %v1385 = vsel %vm417, %v1374, 0
        %v1388 = vsel %vm417, %v1375, 0
        %v1391 = vsel %vm417, %v1376, 0
        %v1394 = vsel %vm417, %v1377, 0
        %v1397 = vsel %vm417, %v1378, 0
        %v1400 = vsel %vm417, %v1379, 0
        %v1403 = vsel %vm417, %v1380, 0
        %1405 = vmatpush.bf16.msra.mxu0 0
        %1406 = vmatpush.bf16.msra.mxu0 0
        %1407 = vmatpush.bf16.msra.mxu0 0
        %1408 = vmatpush.bf16.msra.mxu0 0
        %1409 = vmatpush.bf16.msra.mxu0 0
        %1410 = vmatpush.bf16.msra.mxu0 0
        %1411 = vmatpush.bf16.msra.mxu0 0
        %1412 = vmatpush.bf16.msra.mxu0 %v444
        %1413 = vmatmul.bf16.gmra.mxu0 %v1382
        %v1414 = vpop.f32.mrf.mxu0
        %v1415 = vadd.f32 %v1264, %v1414
        %v1416 = vpop.f32.mrf.mxu0
        %v1417 = vadd.f32 %v1269, %v1416
        %1418 = vmatmul.bf16.gmra.mxu0 %v1385
        %v1419 = vpop.f32.mrf.mxu0
        %v1420 = vadd.f32 %v1274, %v1419
        %v1421 = vpop.f32.mrf.mxu0
        %v1422 = vadd.f32 %v1279, %v1421
        %1423 = vmatmul.bf16.gmra.mxu0 %v1388
        %v1424 = vpop.f32.mrf.mxu0
        %v1425 = vadd.f32 %v1284, %v1424
        %v1426 = vpop.f32.mrf.mxu0
        %v1427 = vadd.f32 %v1289, %v1426
        %1428 = vmatmul.bf16.gmra.mxu0 %v1391
        %v1429 = vpop.f32.mrf.mxu0
        %v1430 = vadd.f32 %v1294, %v1429
        %v1431 = vpop.f32.mrf.mxu0
        %v1432 = vadd.f32 %v1299, %v1431
        %1433 = vmatmul.bf16.gmra.mxu0 %v1394
        %v1434 = vpop.f32.mrf.mxu0
        %v1435 = vadd.f32 %v1304, %v1434
        %v1436 = vpop.f32.mrf.mxu0
        %v1437 = vadd.f32 %v1309, %v1436
        %1438 = vmatmul.bf16.gmra.mxu0 %v1397
        %v1439 = vpop.f32.mrf.mxu0
        %v1440 = vadd.f32 %v1314, %v1439
        %v1441 = vpop.f32.mrf.mxu0
        %v1442 = vadd.f32 %v1319, %v1441
        %1443 = vmatmul.bf16.gmra.mxu0 %v1400
        %v1444 = vpop.f32.mrf.mxu0
        %v1445 = vadd.f32 %v1324, %v1444
        %v1446 = vpop.f32.mrf.mxu0
        %v1447 = vadd.f32 %v1329, %v1446
        %1448 = vmatmul.bf16.gmra.mxu0 %v1403
        %v1449 = vpop.f32.mrf.mxu0
        %v1450 = vadd.f32 %v1334, %v1449
        %v1451 = vpop.f32.mrf.mxu0
        %v1452 = vadd.f32 %v1339, %v1451
        %1453 = vdwg.mxu0
        %1454 = vmatpush.bf16.msra.mxu0 0
        %1455 = vmatpush.bf16.msra.mxu0 0
        %1456 = vmatpush.bf16.msra.mxu0 0
        %1457 = vmatpush.bf16.msra.mxu0 0
        %1458 = vmatpush.bf16.msra.mxu0 0
        %1459 = vmatpush.bf16.msra.mxu0 0
        %1460 = vmatpush.bf16.msra.mxu0 0
        %1461 = vmatpush.bf16.msra.mxu0 %v447
        %1462 = vmatmul.bf16.gmra.mxu0 %v1382
        %v1463 = vpop.f32.mrf.mxu0
        %v1464 = vadd.f32 %v1264, %v1463
        %v1465 = vpop.f32.mrf.mxu0
        %v1466 = vadd.f32 %v1269, %v1465
        %1467 = vmatmul.bf16.gmra.mxu0 %v1385
        %v1468 = vpop.f32.mrf.mxu0
        %v1469 = vadd.f32 %v1274, %v1468
        %v1470 = vpop.f32.mrf.mxu0
        %v1471 = vadd.f32 %v1279, %v1470
        %1472 = vmatmul.bf16.gmra.mxu0 %v1388
        %v1473 = vpop.f32.mrf.mxu0
        %v1474 = vadd.f32 %v1284, %v1473
        %v1475 = vpop.f32.mrf.mxu0
        %v1476 = vadd.f32 %v1289, %v1475
        %1477 = vmatmul.bf16.gmra.mxu0 %v1391
        %v1478 = vpop.f32.mrf.mxu0
        %v1479 = vadd.f32 %v1294, %v1478
        %v1480 = vpop.f32.mrf.mxu0
        %v1481 = vadd.f32 %v1299, %v1480
        %1482 = vmatmul.bf16.gmra.mxu0 %v1394
        %v1483 = vpop.f32.mrf.mxu0
        %v1484 = vadd.f32 %v1304, %v1483
        %v1485 = vpop.f32.mrf.mxu0
        %v1486 = vadd.f32 %v1309, %v1485
        %1487 = vmatmul.bf16.gmra.mxu0 %v1397
        %v1488 = vpop.f32.mrf.mxu0
        %v1489 = vadd.f32 %v1314, %v1488
        %v1490 = vpop.f32.mrf.mxu0
        %v1491 = vadd.f32 %v1319, %v1490
        %1492 = vmatmul.bf16.gmra.mxu0 %v1400
        %v1493 = vpop.f32.mrf.mxu0
        %v1494 = vadd.f32 %v1324, %v1493
        %v1495 = vpop.f32.mrf.mxu0
        %v1496 = vadd.f32 %v1329, %v1495
        %1497 = vmatmul.bf16.gmra.mxu0 %v1403
        %v1498 = vpop.f32.mrf.mxu0
        %v1499 = vadd.f32 %v1334, %v1498
        %v1500 = vpop.f32.mrf.mxu0
        %v1501 = vadd.f32 %v1339, %v1500
        %1502 = vdwg.mxu0
        %v1503 = vmax.f32 %v1415, 0.0
        %v1504 = vmax.f32 %v1464, 0.0
        %v1505 = vmax.f32 %v1417, 0.0
        %v1506 = vmax.f32 %v1466, 0.0
        %v1507 = vmax.f32 %v1420, 0.0
        %v1508 = vmax.f32 %v1469, 0.0
        %v1509 = vmax.f32 %v1422, 0.0
        %v1510 = vmax.f32 %v1471, 0.0
        %v1511 = vmax.f32 %v1425, 0.0
        %v1512 = vmax.f32 %v1474, 0.0
        %v1513 = vmax.f32 %v1427, 0.0
        %v1514 = vmax.f32 %v1476, 0.0
        %v1515 = vmax.f32 %v1430, 0.0
        %v1516 = vmax.f32 %v1479, 0.0
        %v1517 = vmax.f32 %v1432, 0.0
        %v1518 = vmax.f32 %v1481, 0.0
        %v1519 = vmax.f32 %v1435, 0.0
        %v1520 = vmax.f32 %v1484, 0.0
        %v1521 = vmax.f32 %v1437, 0.0
        %v1522 = vmax.f32 %v1486, 0.0
        %v1523 = vmax.f32 %v1440, 0.0
        %v1524 = vmax.f32 %v1489, 0.0
        %v1525 = vmax.f32 %v1442, 0.0
        %v1526 = vmax.f32 %v1491, 0.0
        %v1527 = vmax.f32 %v1445, 0.0
        %v1528 = vmax.f32 %v1494, 0.0
        %v1529 = vmax.f32 %v1447, 0.0
        %v1530 = vmax.f32 %v1496, 0.0
        %v1531 = vmax.f32 %v1450, 0.0
        %v1532 = vmax.f32 %v1499, 0.0
        %v1533 = vmax.f32 %v1452, 0.0
        %v1534 = vmax.f32 %v1501, 0.0
        %v1535 = vld [vmem:[%s3 + $0x100] sm:$0xff]
        %v1536 = vld [vmem:[%s3 + $0x108] sm:$0xff]
        %v1537 = vld [vmem:[%s3 + $0x110] sm:$0xff]
        %v1538 = vld [vmem:[%s3 + $0x118] sm:$0xff]
        %v1539 = vld [vmem:[%s3 + $0x120] sm:$0xff]
        %v1540 = vld [vmem:[%s3 + $0x128] sm:$0xff]
        %v1541 = vld [vmem:[%s3 + $0x130] sm:$0xff]
        %v1542 = vld [vmem:[%s3 + $0x138] sm:$0xff]
        %v1543 = vld [vmem:[%s3 + $0x140] sm:$0xff]
        %v1544 = vld [vmem:[%s3 + $0x148] sm:$0xff]
        %v1545 = vld [vmem:[%s3 + $0x150] sm:$0xff]
        %v1546 = vld [vmem:[%s3 + $0x158] sm:$0xff]
        %v1547 = vld [vmem:[%s3 + $0x160] sm:$0xff]
        %v1548 = vld [vmem:[%s3 + $0x168] sm:$0xff]
        %v1549 = vld [vmem:[%s3 + $0x170] sm:$0xff]
        %v1550 = vld [vmem:[%s3 + $0x178] sm:$0xff]
        %1552 = vset.pattern.permute.xlu0 0
        %1553 = vperm.xlu0 %1552, %v1535
        %v1554 = vpop.permute.xlu0 %1553
        %1557 = vset.pattern.permute.xlu0 0
        %1558 = vperm.xlu0 %1557, %v1536
        %v1559 = vpop.permute.xlu0 %1558
        %1562 = vset.pattern.permute.xlu0 0
        %1563 = vperm.xlu0 %1562, %v1537
        %v1564 = vpop.permute.xlu0 %1563
        %1567 = vset.pattern.permute.xlu0 0
        %1568 = vperm.xlu0 %1567, %v1538
        %v1569 = vpop.permute.xlu0 %1568
        %1572 = vset.pattern.permute.xlu0 0
        %1573 = vperm.xlu0 %1572, %v1539
        %v1574 = vpop.permute.xlu0 %1573
        %1577 = vset.pattern.permute.xlu0 0
        %1578 = vperm.xlu0 %1577, %v1540
        %v1579 = vpop.permute.xlu0 %1578
        %1582 = vset.pattern.permute.xlu0 0
        %1583 = vperm.xlu0 %1582, %v1541
        %v1584 = vpop.permute.xlu0 %1583
        %1587 = vset.pattern.permute.xlu0 0
        %1588 = vperm.xlu0 %1587, %v1542
        %v1589 = vpop.permute.xlu0 %1588
        %1592 = vset.pattern.permute.xlu0 0
        %1593 = vperm.xlu0 %1592, %v1543
        %v1594 = vpop.permute.xlu0 %1593
        %1597 = vset.pattern.permute.xlu0 0
        %1598 = vperm.xlu0 %1597, %v1544
        %v1599 = vpop.permute.xlu0 %1598
        %1602 = vset.pattern.permute.xlu0 0
        %1603 = vperm.xlu0 %1602, %v1545
        %v1604 = vpop.permute.xlu0 %1603
        %1607 = vset.pattern.permute.xlu0 0
        %1608 = vperm.xlu0 %1607, %v1546
        %v1609 = vpop.permute.xlu0 %1608
        %1612 = vset.pattern.permute.xlu0 0
        %1613 = vperm.xlu0 %1612, %v1547
        %v1614 = vpop.permute.xlu0 %1613
        %1617 = vset.pattern.permute.xlu0 0
        %1618 = vperm.xlu0 %1617, %v1548
        %v1619 = vpop.permute.xlu0 %1618
        %1622 = vset.pattern.permute.xlu0 0
        %1623 = vperm.xlu0 %1622, %v1549
        %v1624 = vpop.permute.xlu0 %1623
        %1627 = vset.pattern.permute.xlu0 0
        %1628 = vperm.xlu0 %1627, %v1550
        %v1629 = vpop.permute.xlu0 %1628
        %v1631 = vmul.f32 %v1503, %v1554
        %v1632 = vmul.f32 %v1504, %v1554
        %v1633 = vmul.f32 %v1505, %v1559
        %v1634 = vmul.f32 %v1506, %v1559
        %v1635 = vmul.f32 %v1507, %v1564
        %v1636 = vmul.f32 %v1508, %v1564
        %v1637 = vmul.f32 %v1509, %v1569
        %v1638 = vmul.f32 %v1510, %v1569
        %v1639 = vmul.f32 %v1511, %v1574
        %v1640 = vmul.f32 %v1512, %v1574
        %v1641 = vmul.f32 %v1513, %v1579
        %v1642 = vmul.f32 %v1514, %v1579
        %v1643 = vmul.f32 %v1515, %v1584
        %v1644 = vmul.f32 %v1516, %v1584
        %v1645 = vmul.f32 %v1517, %v1589
        %v1646 = vmul.f32 %v1518, %v1589
        %v1647 = vmul.f32 %v1519, %v1594
        %v1648 = vmul.f32 %v1520, %v1594
        %v1649 = vmul.f32 %v1521, %v1599
        %v1650 = vmul.f32 %v1522, %v1599
        %v1651 = vmul.f32 %v1523, %v1604
        %v1652 = vmul.f32 %v1524, %v1604
        %v1653 = vmul.f32 %v1525, %v1609
        %v1654 = vmul.f32 %v1526, %v1609
        %v1655 = vmul.f32 %v1527, %v1614
        %v1656 = vmul.f32 %v1528, %v1614
        %v1657 = vmul.f32 %v1529, %v1619
        %v1658 = vmul.f32 %v1530, %v1619
        %v1659 = vmul.f32 %v1531, %v1624
        %v1660 = vmul.f32 %v1532, %v1624
        %v1661 = vmul.f32 %v1533, %v1629
        %v1662 = vmul.f32 %v1534, %v1629
        %v1663 = vadd.f32 %v1631, %v1633
        %v1664 = vadd.f32 %v1663, %v1635
        %v1665 = vadd.f32 %v1664, %v1637
        %v1666 = vadd.f32 %v1665, %v1639
        %v1667 = vadd.f32 %v1666, %v1641
        %v1668 = vadd.f32 %v1667, %v1643
        %v1669 = vadd.f32 %v1668, %v1645
        %v1670 = vadd.f32 %v1669, %v1647
        %v1671 = vadd.f32 %v1670, %v1649
        %v1672 = vadd.f32 %v1671, %v1651
        %v1673 = vadd.f32 %v1672, %v1653
        %v1674 = vadd.f32 %v1673, %v1655
        %v1675 = vadd.f32 %v1674, %v1657
        %v1676 = vadd.f32 %v1675, %v1659
        %v1677 = vadd.f32 %v1676, %v1661
        %v1678 = vrot.slane %v1677, 4
        %v1679 = vadd.f32 %v1677, %v1678
        %v1680 = vrot.slane %v1679, 2
        %v1681 = vadd.f32 %v1679, %v1680
        %v1682 = vrot.slane %v1681, 1
        %v1683 = vadd.f32 %v1681, %v1682
        %v1684 = vadd.f32 %v1632, %v1634
        %v1685 = vadd.f32 %v1684, %v1636
        %v1686 = vadd.f32 %v1685, %v1638
        %v1687 = vadd.f32 %v1686, %v1640
        %v1688 = vadd.f32 %v1687, %v1642
        %v1689 = vadd.f32 %v1688, %v1644
        %v1690 = vadd.f32 %v1689, %v1646
        %v1691 = vadd.f32 %v1690, %v1648
        %v1692 = vadd.f32 %v1691, %v1650
        %v1693 = vadd.f32 %v1692, %v1652
        %v1694 = vadd.f32 %v1693, %v1654
        %v1695 = vadd.f32 %v1694, %v1656
        %v1696 = vadd.f32 %v1695, %v1658
        %v1697 = vadd.f32 %v1696, %v1660
        %v1698 = vadd.f32 %v1697, %v1662
        %v1699 = vrot.slane %v1698, 4
        %v1700 = vadd.f32 %v1698, %v1699
        %v1701 = vrot.slane %v1700, 2
        %v1702 = vadd.f32 %v1700, %v1701
        %v1703 = vrot.slane %v1702, 1
        %v1704 = vadd.f32 %v1702, %v1703
        %v1705 = vadd.f32 %v1227, %v1683
        %v1706 = vadd.f32 %v1228, %v1704
        %v1707 = vld [vmem:[%s1 + $0xc0] sm:$0xf]
        %v1708 = vld [vmem:[%s1 + $0xc4] sm:$0xf]
        %v1709 = vld [vmem:[%s1 + $0xc8] sm:$0xf]
        %v1710 = vld [vmem:[%s1 + $0xcc] sm:$0xf]
        %v1711 = vld [vmem:[%s1 + $0xd0] sm:$0xf]
        %v1712 = vld [vmem:[%s1 + $0xd4] sm:$0xf]
        %v1713 = vld [vmem:[%s1 + $0xd8] sm:$0xf]
        %v1714 = vld [vmem:[%s1 + $0xdc] sm:$0xf]
        %v1715 = vld [vmem:[%s1 + $0xe0] sm:$0xf]
        %v1716 = vld [vmem:[%s1 + $0xe4] sm:$0xf]
        %v1717 = vld [vmem:[%s1 + $0xe8] sm:$0xf]
        %v1718 = vld [vmem:[%s1 + $0xec] sm:$0xf]
        %v1719 = vld [vmem:[%s1 + $0xf0] sm:$0xf]
        %v1720 = vld [vmem:[%s1 + $0xf4] sm:$0xf]
        %v1721 = vld [vmem:[%s1 + $0xf8] sm:$0xf]
        %v1722 = vld [vmem:[%s1 + $0xfc] sm:$0xf]
        %v1723 = vld [vmem:[%s2 + $0x180] sm:$0xff]
        %v1724 = vld [vmem:[%s2 + $0x188] sm:$0xff]
        %v1725 = vld [vmem:[%s2 + $0x190] sm:$0xff]
        %v1726 = vld [vmem:[%s2 + $0x198] sm:$0xff]
        %v1727 = vld [vmem:[%s2 + $0x1a0] sm:$0xff]
        %v1728 = vld [vmem:[%s2 + $0x1a8] sm:$0xff]
        %v1729 = vld [vmem:[%s2 + $0x1b0] sm:$0xff]
        %v1730 = vld [vmem:[%s2 + $0x1b8] sm:$0xff]
        %v1731 = vld [vmem:[%s2 + $0x1c0] sm:$0xff]
        %v1732 = vld [vmem:[%s2 + $0x1c8] sm:$0xff]
        %v1733 = vld [vmem:[%s2 + $0x1d0] sm:$0xff]
        %v1734 = vld [vmem:[%s2 + $0x1d8] sm:$0xff]
        %v1735 = vld [vmem:[%s2 + $0x1e0] sm:$0xff]
        %v1736 = vld [vmem:[%s2 + $0x1e8] sm:$0xff]
        %v1737 = vld [vmem:[%s2 + $0x1f0] sm:$0xff]
        %v1738 = vld [vmem:[%s2 + $0x1f8] sm:$0xff]
        %1740 = vset.pattern.permute.xlu0 0
        %1741 = vperm.xlu0 %1740, %v1723
        %v1742 = vpop.permute.xlu0 %1741
        %1745 = vset.pattern.permute.xlu0 0
        %1746 = vperm.xlu0 %1745, %v1724
        %v1747 = vpop.permute.xlu0 %1746
        %1750 = vset.pattern.permute.xlu0 0
        %1751 = vperm.xlu0 %1750, %v1725
        %v1752 = vpop.permute.xlu0 %1751
        %1755 = vset.pattern.permute.xlu0 0
        %1756 = vperm.xlu0 %1755, %v1726
        %v1757 = vpop.permute.xlu0 %1756
        %1760 = vset.pattern.permute.xlu0 0
        %1761 = vperm.xlu0 %1760, %v1727
        %v1762 = vpop.permute.xlu0 %1761
        %1765 = vset.pattern.permute.xlu0 0
        %1766 = vperm.xlu0 %1765, %v1728
        %v1767 = vpop.permute.xlu0 %1766
        %1770 = vset.pattern.permute.xlu0 0
        %1771 = vperm.xlu0 %1770, %v1729
        %v1772 = vpop.permute.xlu0 %1771
        %1775 = vset.pattern.permute.xlu0 0
        %1776 = vperm.xlu0 %1775, %v1730
        %v1777 = vpop.permute.xlu0 %1776
        %1780 = vset.pattern.permute.xlu0 0
        %1781 = vperm.xlu0 %1780, %v1731
        %v1782 = vpop.permute.xlu0 %1781
        %1785 = vset.pattern.permute.xlu0 0
        %1786 = vperm.xlu0 %1785, %v1732
        %v1787 = vpop.permute.xlu0 %1786
        %1790 = vset.pattern.permute.xlu0 0
        %1791 = vperm.xlu0 %1790, %v1733
        %v1792 = vpop.permute.xlu0 %1791
        %1795 = vset.pattern.permute.xlu0 0
        %1796 = vperm.xlu0 %1795, %v1734
        %v1797 = vpop.permute.xlu0 %1796
        %1800 = vset.pattern.permute.xlu0 0
        %1801 = vperm.xlu0 %1800, %v1735
        %v1802 = vpop.permute.xlu0 %1801
        %1805 = vset.pattern.permute.xlu0 0
        %1806 = vperm.xlu0 %1805, %v1736
        %v1807 = vpop.permute.xlu0 %1806
        %1810 = vset.pattern.permute.xlu0 0
        %1811 = vperm.xlu0 %1810, %v1737
        %v1812 = vpop.permute.xlu0 %1811
        %1815 = vset.pattern.permute.xlu0 0
        %1816 = vperm.xlu0 %1815, %v1738
        %v1817 = vpop.permute.xlu0 %1816
        %v1835 = vunpack.c.l.b16 %v1707
        %v1836 = vunpack.c.l.b16 %v1708
        %v1837 = vunpack.c.l.b16 %v1709
        %v1838 = vunpack.c.l.b16 %v1710
        %v1839 = vunpack.c.l.b16 %v1711
        %v1840 = vunpack.c.l.b16 %v1712
        %v1841 = vunpack.c.l.b16 %v1713
        %v1842 = vunpack.c.l.b16 %v1714
        %v1843 = vunpack.c.l.b16 %v1715
        %v1844 = vunpack.c.l.b16 %v1716
        %v1845 = vunpack.c.l.b16 %v1717
        %v1846 = vunpack.c.l.b16 %v1718
        %v1847 = vunpack.c.l.b16 %v1719
        %v1848 = vunpack.c.l.b16 %v1720
        %v1849 = vunpack.c.l.b16 %v1721
        %v1850 = vunpack.c.l.b16 %v1722
        %v1851 = vpack.c.b16 %v1836, %v1835
        %v1852 = vpack.c.b16 %v1838, %v1837
        %v1853 = vpack.c.b16 %v1840, %v1839
        %v1854 = vpack.c.b16 %v1842, %v1841
        %v1855 = vpack.c.b16 %v1844, %v1843
        %v1856 = vpack.c.b16 %v1846, %v1845
        %v1857 = vpack.c.b16 %v1848, %v1847
        %v1858 = vpack.c.b16 %v1850, %v1849
        %v1860 = vsel %vm417, %v1851, 0
        %v1863 = vsel %vm417, %v1852, 0
        %v1866 = vsel %vm417, %v1853, 0
        %v1869 = vsel %vm417, %v1854, 0
        %v1872 = vsel %vm417, %v1855, 0
        %v1875 = vsel %vm417, %v1856, 0
        %v1878 = vsel %vm417, %v1857, 0
        %v1881 = vsel %vm417, %v1858, 0
        %1883 = vmatpush.bf16.msra.mxu0 0
        %1884 = vmatpush.bf16.msra.mxu0 0
        %1885 = vmatpush.bf16.msra.mxu0 0
        %1886 = vmatpush.bf16.msra.mxu0 0
        %1887 = vmatpush.bf16.msra.mxu0 0
        %1888 = vmatpush.bf16.msra.mxu0 0
        %1889 = vmatpush.bf16.msra.mxu0 0
        %1890 = vmatpush.bf16.msra.mxu0 %v444
        %1891 = vmatmul.bf16.gmra.mxu0 %v1860
        %v1892 = vpop.f32.mrf.mxu0
        %v1893 = vadd.f32 %v1742, %v1892
        %v1894 = vpop.f32.mrf.mxu0
        %v1895 = vadd.f32 %v1747, %v1894
        %1896 = vmatmul.bf16.gmra.mxu0 %v1863
        %v1897 = vpop.f32.mrf.mxu0
        %v1898 = vadd.f32 %v1752, %v1897
        %v1899 = vpop.f32.mrf.mxu0
        %v1900 = vadd.f32 %v1757, %v1899
        %1901 = vmatmul.bf16.gmra.mxu0 %v1866
        %v1902 = vpop.f32.mrf.mxu0
        %v1903 = vadd.f32 %v1762, %v1902
        %v1904 = vpop.f32.mrf.mxu0
        %v1905 = vadd.f32 %v1767, %v1904
        %1906 = vmatmul.bf16.gmra.mxu0 %v1869
        %v1907 = vpop.f32.mrf.mxu0
        %v1908 = vadd.f32 %v1772, %v1907
        %v1909 = vpop.f32.mrf.mxu0
        %v1910 = vadd.f32 %v1777, %v1909
        %1911 = vmatmul.bf16.gmra.mxu0 %v1872
        %v1912 = vpop.f32.mrf.mxu0
        %v1913 = vadd.f32 %v1782, %v1912
        %v1914 = vpop.f32.mrf.mxu0
        %v1915 = vadd.f32 %v1787, %v1914
        %1916 = vmatmul.bf16.gmra.mxu0 %v1875
        %v1917 = vpop.f32.mrf.mxu0
        %v1918 = vadd.f32 %v1792, %v1917
        %v1919 = vpop.f32.mrf.mxu0
        %v1920 = vadd.f32 %v1797, %v1919
        %1921 = vmatmul.bf16.gmra.mxu0 %v1878
        %v1922 = vpop.f32.mrf.mxu0
        %v1923 = vadd.f32 %v1802, %v1922
        %v1924 = vpop.f32.mrf.mxu0
        %v1925 = vadd.f32 %v1807, %v1924
        %1926 = vmatmul.bf16.gmra.mxu0 %v1881
        %v1927 = vpop.f32.mrf.mxu0
        %v1928 = vadd.f32 %v1812, %v1927
        %v1929 = vpop.f32.mrf.mxu0
        %v1930 = vadd.f32 %v1817, %v1929
        %1931 = vdwg.mxu0
        %1932 = vmatpush.bf16.msra.mxu0 0
        %1933 = vmatpush.bf16.msra.mxu0 0
        %1934 = vmatpush.bf16.msra.mxu0 0
        %1935 = vmatpush.bf16.msra.mxu0 0
        %1936 = vmatpush.bf16.msra.mxu0 0
        %1937 = vmatpush.bf16.msra.mxu0 0
        %1938 = vmatpush.bf16.msra.mxu0 0
        %1939 = vmatpush.bf16.msra.mxu0 %v447
        %1940 = vmatmul.bf16.gmra.mxu0 %v1860
        %v1941 = vpop.f32.mrf.mxu0
        %v1942 = vadd.f32 %v1742, %v1941
        %v1943 = vpop.f32.mrf.mxu0
        %v1944 = vadd.f32 %v1747, %v1943
        %1945 = vmatmul.bf16.gmra.mxu0 %v1863
        %v1946 = vpop.f32.mrf.mxu0
        %v1947 = vadd.f32 %v1752, %v1946
        %v1948 = vpop.f32.mrf.mxu0
        %v1949 = vadd.f32 %v1757, %v1948
        %1950 = vmatmul.bf16.gmra.mxu0 %v1866
        %v1951 = vpop.f32.mrf.mxu0
        %v1952 = vadd.f32 %v1762, %v1951
        %v1953 = vpop.f32.mrf.mxu0
        %v1954 = vadd.f32 %v1767, %v1953
        %1955 = vmatmul.bf16.gmra.mxu0 %v1869
        %v1956 = vpop.f32.mrf.mxu0
        %v1957 = vadd.f32 %v1772, %v1956
        %v1958 = vpop.f32.mrf.mxu0
        %v1959 = vadd.f32 %v1777, %v1958
        %1960 = vmatmul.bf16.gmra.mxu0 %v1872
        %v1961 = vpop.f32.mrf.mxu0
        %v1962 = vadd.f32 %v1782, %v1961
        %v1963 = vpop.f32.mrf.mxu0
        %v1964 = vadd.f32 %v1787, %v1963
        %1965 = vmatmul.bf16.gmra.mxu0 %v1875
        %v1966 = vpop.f32.mrf.mxu0
        %v1967 = vadd.f32 %v1792, %v1966
        %v1968 = vpop.f32.mrf.mxu0
        %v1969 = vadd.f32 %v1797, %v1968
        %1970 = vmatmul.bf16.gmra.mxu0 %v1878
        %v1971 = vpop.f32.mrf.mxu0
        %v1972 = vadd.f32 %v1802, %v1971
        %v1973 = vpop.f32.mrf.mxu0
        %v1974 = vadd.f32 %v1807, %v1973
        %1975 = vmatmul.bf16.gmra.mxu0 %v1881
        %v1976 = vpop.f32.mrf.mxu0
        %v1977 = vadd.f32 %v1812, %v1976
        %v1978 = vpop.f32.mrf.mxu0
        %v1979 = vadd.f32 %v1817, %v1978
        %1980 = vdwg.mxu0
        %v1981 = vmax.f32 %v1893, 0.0
        %v1982 = vmax.f32 %v1942, 0.0
        %v1983 = vmax.f32 %v1895, 0.0
        %v1984 = vmax.f32 %v1944, 0.0
        %v1985 = vmax.f32 %v1898, 0.0
        %v1986 = vmax.f32 %v1947, 0.0
        %v1987 = vmax.f32 %v1900, 0.0
        %v1988 = vmax.f32 %v1949, 0.0
        %v1989 = vmax.f32 %v1903, 0.0
        %v1990 = vmax.f32 %v1952, 0.0
        %v1991 = vmax.f32 %v1905, 0.0
        %v1992 = vmax.f32 %v1954, 0.0
        %v1993 = vmax.f32 %v1908, 0.0
        %v1994 = vmax.f32 %v1957, 0.0
        %v1995 = vmax.f32 %v1910, 0.0
        %v1996 = vmax.f32 %v1959, 0.0
        %v1997 = vmax.f32 %v1913, 0.0
        %v1998 = vmax.f32 %v1962, 0.0
        %v1999 = vmax.f32 %v1915, 0.0
        %v2000 = vmax.f32 %v1964, 0.0
        %v2001 = vmax.f32 %v1918, 0.0
        %v2002 = vmax.f32 %v1967, 0.0
        %v2003 = vmax.f32 %v1920, 0.0
        %v2004 = vmax.f32 %v1969, 0.0
        %v2005 = vmax.f32 %v1923, 0.0
        %v2006 = vmax.f32 %v1972, 0.0
        %v2007 = vmax.f32 %v1925, 0.0
        %v2008 = vmax.f32 %v1974, 0.0
        %v2009 = vmax.f32 %v1928, 0.0
        %v2010 = vmax.f32 %v1977, 0.0
        %v2011 = vmax.f32 %v1930, 0.0
        %v2012 = vmax.f32 %v1979, 0.0
        %v2013 = vld [vmem:[%s3 + $0x180] sm:$0xff]
        %v2014 = vld [vmem:[%s3 + $0x188] sm:$0xff]
        %v2015 = vld [vmem:[%s3 + $0x190] sm:$0xff]
        %v2016 = vld [vmem:[%s3 + $0x198] sm:$0xff]
        %v2017 = vld [vmem:[%s3 + $0x1a0] sm:$0xff]
        %v2018 = vld [vmem:[%s3 + $0x1a8] sm:$0xff]
        %v2019 = vld [vmem:[%s3 + $0x1b0] sm:$0xff]
        %v2020 = vld [vmem:[%s3 + $0x1b8] sm:$0xff]
        %v2021 = vld [vmem:[%s3 + $0x1c0] sm:$0xff]
        %v2022 = vld [vmem:[%s3 + $0x1c8] sm:$0xff]
        %v2023 = vld [vmem:[%s3 + $0x1d0] sm:$0xff]
        %v2024 = vld [vmem:[%s3 + $0x1d8] sm:$0xff]
        %v2025 = vld [vmem:[%s3 + $0x1e0] sm:$0xff]
        %v2026 = vld [vmem:[%s3 + $0x1e8] sm:$0xff]
        %v2027 = vld [vmem:[%s3 + $0x1f0] sm:$0xff]
        %v2028 = vld [vmem:[%s3 + $0x1f8] sm:$0xff]
        %2030 = vset.pattern.permute.xlu0 0
        %2031 = vperm.xlu0 %2030, %v2013
        %v2032 = vpop.permute.xlu0 %2031
        %2035 = vset.pattern.permute.xlu0 0
        %2036 = vperm.xlu0 %2035, %v2014
        %v2037 = vpop.permute.xlu0 %2036
        %2040 = vset.pattern.permute.xlu0 0
        %2041 = vperm.xlu0 %2040, %v2015
        %v2042 = vpop.permute.xlu0 %2041
        %2045 = vset.pattern.permute.xlu0 0
        %2046 = vperm.xlu0 %2045, %v2016
        %v2047 = vpop.permute.xlu0 %2046
        %2050 = vset.pattern.permute.xlu0 0
        %2051 = vperm.xlu0 %2050, %v2017
        %v2052 = vpop.permute.xlu0 %2051
        %2055 = vset.pattern.permute.xlu0 0
        %2056 = vperm.xlu0 %2055, %v2018
        %v2057 = vpop.permute.xlu0 %2056
        %2060 = vset.pattern.permute.xlu0 0
        %2061 = vperm.xlu0 %2060, %v2019
        %v2062 = vpop.permute.xlu0 %2061
        %2065 = vset.pattern.permute.xlu0 0
        %2066 = vperm.xlu0 %2065, %v2020
        %v2067 = vpop.permute.xlu0 %2066
        %2070 = vset.pattern.permute.xlu0 0
        %2071 = vperm.xlu0 %2070, %v2021
        %v2072 = vpop.permute.xlu0 %2071
        %2075 = vset.pattern.permute.xlu0 0
        %2076 = vperm.xlu0 %2075, %v2022
        %v2077 = vpop.permute.xlu0 %2076
        %2080 = vset.pattern.permute.xlu0 0
        %2081 = vperm.xlu0 %2080, %v2023
        %v2082 = vpop.permute.xlu0 %2081
        %2085 = vset.pattern.permute.xlu0 0
        %2086 = vperm.xlu0 %2085, %v2024
        %v2087 = vpop.permute.xlu0 %2086
        %2090 = vset.pattern.permute.xlu0 0
        %2091 = vperm.xlu0 %2090, %v2025
        %v2092 = vpop.permute.xlu0 %2091
        %2095 = vset.pattern.permute.xlu0 0
        %2096 = vperm.xlu0 %2095, %v2026
        %v2097 = vpop.permute.xlu0 %2096
        %2100 = vset.pattern.permute.xlu0 0
        %2101 = vperm.xlu0 %2100, %v2027
        %v2102 = vpop.permute.xlu0 %2101
        %2105 = vset.pattern.permute.xlu0 0
        %2106 = vperm.xlu0 %2105, %v2028
        %v2107 = vpop.permute.xlu0 %2106
        %v2109 = vmul.f32 %v1981, %v2032
        %v2110 = vmul.f32 %v1982, %v2032
        %v2111 = vmul.f32 %v1983, %v2037
        %v2112 = vmul.f32 %v1984, %v2037
        %v2113 = vmul.f32 %v1985, %v2042
        %v2114 = vmul.f32 %v1986, %v2042
        %v2115 = vmul.f32 %v1987, %v2047
        %v2116 = vmul.f32 %v1988, %v2047
        %v2117 = vmul.f32 %v1989, %v2052
        %v2118 = vmul.f32 %v1990, %v2052
        %v2119 = vmul.f32 %v1991, %v2057
        %v2120 = vmul.f32 %v1992, %v2057
        %v2121 = vmul.f32 %v1993, %v2062
        %v2122 = vmul.f32 %v1994, %v2062
        %v2123 = vmul.f32 %v1995, %v2067
        %v2124 = vmul.f32 %v1996, %v2067
        %v2125 = vmul.f32 %v1997, %v2072
        %v2126 = vmul.f32 %v1998, %v2072
        %v2127 = vmul.f32 %v1999, %v2077
        %v2128 = vmul.f32 %v2000, %v2077
        %v2129 = vmul.f32 %v2001, %v2082
        %v2130 = vmul.f32 %v2002, %v2082
        %v2131 = vmul.f32 %v2003, %v2087
        %v2132 = vmul.f32 %v2004, %v2087
        %v2133 = vmul.f32 %v2005, %v2092
        %v2134 = vmul.f32 %v2006, %v2092
        %v2135 = vmul.f32 %v2007, %v2097
        %v2136 = vmul.f32 %v2008, %v2097
        %v2137 = vmul.f32 %v2009, %v2102
        %v2138 = vmul.f32 %v2010, %v2102
        %v2139 = vmul.f32 %v2011, %v2107
        %v2140 = vmul.f32 %v2012, %v2107
        %v2141 = vadd.f32 %v2109, %v2111
        %v2142 = vadd.f32 %v2141, %v2113
        %v2143 = vadd.f32 %v2142, %v2115
        %v2144 = vadd.f32 %v2143, %v2117
        %v2145 = vadd.f32 %v2144, %v2119
        %v2146 = vadd.f32 %v2145, %v2121
        %v2147 = vadd.f32 %v2146, %v2123
        %v2148 = vadd.f32 %v2147, %v2125
        %v2149 = vadd.f32 %v2148, %v2127
        %v2150 = vadd.f32 %v2149, %v2129
        %v2151 = vadd.f32 %v2150, %v2131
        %v2152 = vadd.f32 %v2151, %v2133
        %v2153 = vadd.f32 %v2152, %v2135
        %v2154 = vadd.f32 %v2153, %v2137
        %v2155 = vadd.f32 %v2154, %v2139
        %v2156 = vrot.slane %v2155, 4
        %v2157 = vadd.f32 %v2155, %v2156
        %v2158 = vrot.slane %v2157, 2
        %v2159 = vadd.f32 %v2157, %v2158
        %v2160 = vrot.slane %v2159, 1
        %v2161 = vadd.f32 %v2159, %v2160
        %v2162 = vadd.f32 %v2110, %v2112
        %v2163 = vadd.f32 %v2162, %v2114
        %v2164 = vadd.f32 %v2163, %v2116
        %v2165 = vadd.f32 %v2164, %v2118
        %v2166 = vadd.f32 %v2165, %v2120
        %v2167 = vadd.f32 %v2166, %v2122
        %v2168 = vadd.f32 %v2167, %v2124
        %v2169 = vadd.f32 %v2168, %v2126
        %v2170 = vadd.f32 %v2169, %v2128
        %v2171 = vadd.f32 %v2170, %v2130
        %v2172 = vadd.f32 %v2171, %v2132
        %v2173 = vadd.f32 %v2172, %v2134
        %v2174 = vadd.f32 %v2173, %v2136
        %v2175 = vadd.f32 %v2174, %v2138
        %v2176 = vadd.f32 %v2175, %v2140
        %v2177 = vrot.slane %v2176, 4
        %v2178 = vadd.f32 %v2176, %v2177
        %v2179 = vrot.slane %v2178, 2
        %v2180 = vadd.f32 %v2178, %v2179
        %v2181 = vrot.slane %v2180, 1
        %v2182 = vadd.f32 %v2180, %v2181
        %v2183 = vadd.f32 %v1705, %v2161
        %v2184 = vadd.f32 %v1706, %v2182
        %s2185 = sld [smem:[#allocation2]]
        %v2186 = vstv %s2185
        %v2187 = vadd.f32 %v2183, %v2186
        %v2188 = vadd.f32 %v2184, %v2186
        %v2191 = vrot.slane %v2188, 7
        %vm2192 = vcmask 1040384
        %v2193 = vsel %vm2192, %v2187, %v2191
        %v2195 = vlaneseq
        %vm2196 = vcmp.ge.s32.totalorder %v2195, 0
        %vm2197 = vcmp.lt.s32.totalorder %v2195, 256
        %vm2198 = vmand %vm2196, %vm2197
        %2199 = vst.msk [vmem:[%s243] sm:$0x3] %vm2198, %v2193
        %s2200 = sand.u32 %s154, 1
        %s2201 = scalar_lea.sflag [#allocation4], %s2200
        %s2202 = sand.u32 %s154, 1
        %s2203 = smul.addr %s2202, 2
        %s2204 = scalar_lea.vmem [#allocation3], %s2203
        // Predicated region
        $region41: #{tpu_custom_call.1} parent=39 // pred_check
          %p2205 = pneg %p164
        $region42: #{tpu_custom_call.1} parent=39 // pred_check_branch
          %2207 = sbr.rel (%p2205) target = $region44
        $region43: #{tpu_custom_call.1} parent=39 // pred_region
          %s2208 = smul.u32 2, %s25
          %2210 = vsyncadd %s2201, 0
          %s2211 = smul.addr %s24, 2
          %s2212 = sadd.s32 %s2208, %s2211
          %s2213 = scalar_lea.hbm %s5, %s2212
          %s2215 = sshll.u32 %s2204, 4
          %s2216 = int_to_ptr.vmem [resolvable:$true] %s2215
          %s2217 = sshll.u32 %s2213, 4
          %s2218 = int_to_ptr.hbm [resolvable:$true] %s2217
          %2220 = dma.vmem_to_hbm [thread:$0]  %s2216, 32, %s2218, %s2201
        $region44: #{tpu_custom_call.1} parent=39 // pred_fallthru
          _
      $region40: #{tpu_custom_call.1} parent=5 // pred_fallthru
        _
      %p2221 = scmp.le.s32.totalorder 2, %s15
      // Predicated region
      $region45: #{tpu_custom_call.1} parent=5 // pred_check
        %p2222 = pneg %p2221
      $region46: #{tpu_custom_call.1} parent=5 // pred_check_branch
        %2224 = sbr.rel (%p2222) target = $region48
      $region47: #{tpu_custom_call.1} parent=5 // pred_region
        %s2225 = ssub.s32 %s15, 2
        // Predicated region
        $region49: #{tpu_custom_call.1} parent=47 // pred_check
          %p2226 = pneg %p170
        $region50: #{tpu_custom_call.1} parent=47 // pred_check_branch
          %2228 = sbr.rel (%p2226) target = $region52
        $region51: #{tpu_custom_call.1} parent=47 // pred_region
          %s2229 = sand.u32 %s155, 1
          %s2230 = scalar_lea.sflag [#allocation4], %s2229
          %s2231 = sand.u32 %s155, 1
          %s2232 = smul.addr %s2231, 2
          %s2233 = scalar_lea.vmem [#allocation3], %s2232
          %2235 = dma.done %s2230, 32
        $region52: #{tpu_custom_call.1} parent=47 // pred_fallthru
          _
      $region48: #{tpu_custom_call.1} parent=5 // pred_fallthru
        _
    $region6: #{tpu_custom_call.1} parent=1 // loop_footer
      %s19 = sadd.s32 1, %s15
    $region7: #{tpu_custom_call.1} parent=1 // loop_footer_branch
      %14 = sbr.rel target = $region3
    $region8: #{tpu_custom_call.1} parent=1 // loop_exit
      _
    %2236 = vsyncpa [#allocation4], 1
    %s2237 = scalar_lea.sflag [#allocation4], 1
    %2238 = vsyncpa %s2237, 1

</llo_original>
